<compile_context>
chip_gen: v5e
topology: v5e:2x2
jax: 0.10.0
libtpu: 0.0.40
codegen_flags: <defaults>
</compile_context>

<pallas_src>
import jax
import jax.numpy as jnp
from jax.experimental import pallas as pl
from jax.experimental.pallas import tpu as pltpu

LATENT_SIZE = 20
HIDDEN_SIZE = 400
OUTPUT_SIZE = 784

HIDDEN_PAD = 512   # multiple of 128 lanes; aligns with 256-wide v6e/v7x MXU
OUTPUT_PAD = 896   # multiple of 128 lanes
MAX_TILE_B = 512   # batch tile cap (safe for v7x 32 MiB scoped VMEM)


def _round_up(x, m):
    return (x + m - 1) // m * m


def generator_kernel(z_ref, w1_ref, b1_ref, w2_ref, b2_ref, out_ref):
    # Layer 1: Linear(latent -> hidden_pad) + ReLU
    #   bf16 operands on the MXU, f32 accumulation, f32 epilogue.
    z = z_ref[...].astype(jnp.bfloat16)
    h = jnp.dot(z, w1_ref[...], preferred_element_type=jnp.float32)
    h = jnp.maximum(h + b1_ref[...], 0.0)
    # Layer 2: Linear(hidden_pad -> output_pad) + Sigmoid
    logits = jnp.dot(h.astype(jnp.bfloat16), w2_ref[...],
                     preferred_element_type=jnp.float32)
    out_ref[...] = jax.nn.sigmoid(logits + b2_ref[...])


def prepare_params(w1, b1, w2, b2):
    """Pad to lane-aligned widths and cast matmul weights to bf16 (one-time).

    Inputs (f32, pre-transposed vs. PyTorch's (out, in)):
      w1: (LATENT_SIZE, HIDDEN_SIZE)   b1: (HIDDEN_SIZE,)
      w2: (HIDDEN_SIZE, OUTPUT_SIZE)   b2: (OUTPUT_SIZE,)
    Padded columns/rows are zero so the sliced output is exact.
    """
    w1p = jnp.zeros((LATENT_SIZE, HIDDEN_PAD), jnp.float32)
    w1p = w1p.at[:, :HIDDEN_SIZE].set(w1).astype(jnp.bfloat16)
    b1p = jnp.zeros((1, HIDDEN_PAD), jnp.float32)
    b1p = b1p.at[:, :HIDDEN_SIZE].set(b1.reshape(1, -1))
    w2p = jnp.zeros((HIDDEN_PAD, OUTPUT_PAD), jnp.float32)
    w2p = w2p.at[:HIDDEN_SIZE, :OUTPUT_SIZE].set(w2).astype(jnp.bfloat16)
    b2p = jnp.zeros((1, OUTPUT_PAD), jnp.float32)
    b2p = b2p.at[:, :OUTPUT_SIZE].set(b2.reshape(1, -1))
    return w1p, b1p, w2p, b2p


def generator_forward(z, w1p, b1p, w2p, b2p):
    """Fused two-layer MLP generator.

    z : (B, LATENT_SIZE) float32
    w1p/b1p/w2p/b2p : prepared (padded, bf16 weights) params from prepare_params.
    returns (B, OUTPUT_SIZE) float32 in [0, 1]
    """
    B = z.shape[0]
    tile_b = min(MAX_TILE_B, _round_up(B, 8))
    b_pad = _round_up(B, tile_b)
    if b_pad != B:
        z = jnp.pad(z, ((0, b_pad - B), (0, 0)))

    out = pl.pallas_call(
        generator_kernel,
        out_shape=jax.ShapeDtypeStruct((b_pad, OUTPUT_PAD), jnp.float32),
        grid=(b_pad // tile_b,),
        in_specs=[
            # Batch tile of z moves with the grid; weights/biases are resident
            # (constant index_map -> fetched once, reused every step).
            pl.BlockSpec((tile_b, LATENT_SIZE), lambda i: (i, 0)),
            pl.BlockSpec((LATENT_SIZE, HIDDEN_PAD), lambda i: (0, 0)),
            pl.BlockSpec((1, HIDDEN_PAD), lambda i: (0, 0)),
            pl.BlockSpec((HIDDEN_PAD, OUTPUT_PAD), lambda i: (0, 0)),
            pl.BlockSpec((1, OUTPUT_PAD), lambda i: (0, 0)),
        ],
        out_specs=pl.BlockSpec((tile_b, OUTPUT_PAD), lambda i: (i, 0)),
        compiler_params=pltpu.CompilerParams(
            dimension_semantics=("parallel",),
        ),
    )(z, w1p, b1p, w2p, b2p)

    return out[:B, :OUTPUT_SIZE]


def init_params(key):
    """PyTorch nn.Linear default init: U(-1/sqrt(fan_in), +1/sqrt(fan_in))."""
    k1, k2, k3, k4 = jax.random.split(key, 4)
    bound1 = 1.0 / (LATENT_SIZE ** 0.5)
    bound2 = 1.0 / (HIDDEN_SIZE ** 0.5)
    # Stored as (in, out) — transposed relative to PyTorch's (out, in).
    w1 = jax.random.uniform(k1, (LATENT_SIZE, HIDDEN_SIZE), jnp.float32,
                            minval=-bound1, maxval=bound1)
    b1 = jax.random.uniform(k2, (HIDDEN_SIZE,), jnp.float32,
                            minval=-bound1, maxval=bound1)
    w2 = jax.random.uniform(k3, (HIDDEN_SIZE, OUTPUT_SIZE), jnp.float32,
                            minval=-bound2, maxval=bound2)
    b2 = jax.random.uniform(k4, (OUTPUT_SIZE,), jnp.float32,
                            minval=-bound2, maxval=bound2)
    return w1, b1, w2, b2


def reference_forward(z, w1, b1, w2, b2):
    h = jnp.maximum(z @ w1 + b1[None, :], 0.0)
    return jax.nn.sigmoid(h @ w2 + b2[None, :])


if __name__ == "__main__":
    key = jax.random.PRNGKey(0)
    k_param, k_z = jax.random.split(key)

    batch = 8
    z = jax.random.normal(k_z, (batch, LATENT_SIZE), dtype=jnp.float32)
    w1, b1, w2, b2 = init_params(k_param)
    params = prepare_params(w1, b1, w2, b2)

    out = generator_forward(z, *params)
    out = jax.block_until_ready(out)

    # Sanity check against a pure-f32 JAX reference (bf16 matmuls -> loose tol).
    ref = jax.block_until_ready(reference_forward(z, w1, b1, w2, b2))
    assert out.shape == (batch, OUTPUT_SIZE), out.shape
    assert jnp.all(jnp.isfinite(out))
    assert jnp.max(jnp.abs(out - ref)) < 2e-2, "mismatch vs reference"

    print("KERNEL_OK")
</pallas_src>

<mosaic_0001>
module attributes {stable_mosaic.version = 11 : i64} {
  func.func @generator_kernel(%arg0: i32, %arg1: memref<8x20xf32, #tpu.memory_space<vmem>>, %arg2: memref<20x512xbf16, #tpu.memory_space<vmem>>, %arg3: memref<1x512xf32, #tpu.memory_space<vmem>>, %arg4: memref<512x896xbf16, #tpu.memory_space<vmem>>, %arg5: memref<1x896xf32, #tpu.memory_space<vmem>>, %arg6: memref<8x896xf32, #tpu.memory_space<vmem>>) attributes {dimension_semantics = [#tpu.dimension_semantics<parallel>], iteration_bounds = array<i64: 1>, scalar_prefetch = 0 : i64, scratch_operands = 0 : i64, tpu.core_type = #tpu.core_type<tc>, window_params = [{transform_indices = @transform_0, window_bounds = array<i64: 8, 20>}, {pipeline_mode = #tpu.pipeline_mode<synchronous>, transform_indices = @transform_1, window_bounds = array<i64: 20, 512>}, {pipeline_mode = #tpu.pipeline_mode<synchronous>, transform_indices = @transform_2, window_bounds = array<i64: 1, 512>}, {pipeline_mode = #tpu.pipeline_mode<synchronous>, transform_indices = @transform_3, window_bounds = array<i64: 512, 896>}, {pipeline_mode = #tpu.pipeline_mode<synchronous>, transform_indices = @transform_4, window_bounds = array<i64: 1, 896>}, {transform_indices = @transform_5, window_bounds = array<i64: 8, 896>}]} {
    %c0 = arith.constant 0 : index
    %c0_0 = arith.constant 0 : index
    %0 = vector.load %arg1[%c0, %c0_0] : memref<8x20xf32, #tpu.memory_space<vmem>>, vector<8x20xf32>
    %1 = arith.truncf %0 : vector<8x20xf32> to vector<8x20xbf16>
    %c0_1 = arith.constant 0 : index
    %c0_2 = arith.constant 0 : index
    %2 = vector.load %arg2[%c0_1, %c0_2] : memref<20x512xbf16, #tpu.memory_space<vmem>>, vector<20x512xbf16>
    %cst = arith.constant dense<0.000000e+00> : vector<8x512xf32>
    %3 = tpu.matmul %1, %2, %cst {dimension_numbers = #tpu.dot_dimension_numbers<[1], [0], [0], [1], [0, 0, 1, 1], [], []>} : vector<8x20xbf16>, vector<20x512xbf16>, vector<8x512xf32> -> vector<8x512xf32>
    %c0_3 = arith.constant 0 : index
    %c0_4 = arith.constant 0 : index
    %4 = vector.load %arg3[%c0_3, %c0_4] : memref<1x512xf32, #tpu.memory_space<vmem>>, vector<1x512xf32>
    %5 = vector.broadcast %4 : vector<1x512xf32> to vector<8x512xf32>
    %6 = arith.addf %3, %5 : vector<8x512xf32>
    %cst_5 = arith.constant 0.000000e+00 : f32
    %7 = vector.broadcast %cst_5 : f32 to vector<8x512xf32>
    %8 = arith.maximumf %6, %7 : vector<8x512xf32>
    %9 = arith.truncf %8 : vector<8x512xf32> to vector<8x512xbf16>
    %c0_6 = arith.constant 0 : index
    %c0_7 = arith.constant 0 : index
    %10 = vector.load %arg4[%c0_6, %c0_7] : memref<512x896xbf16, #tpu.memory_space<vmem>>, vector<512x896xbf16>
    %cst_8 = arith.constant dense<0.000000e+00> : vector<8x896xf32>
    %11 = tpu.matmul %9, %10, %cst_8 {dimension_numbers = #tpu.dot_dimension_numbers<[1], [0], [0], [1], [0, 0, 1, 1], [], []>} : vector<8x512xbf16>, vector<512x896xbf16>, vector<8x896xf32> -> vector<8x896xf32>
    %c0_9 = arith.constant 0 : index
    %c0_10 = arith.constant 0 : index
    %12 = vector.load %arg5[%c0_9, %c0_10] : memref<1x896xf32, #tpu.memory_space<vmem>>, vector<1x896xf32>
    %13 = vector.broadcast %12 : vector<1x896xf32> to vector<8x896xf32>
    %14 = arith.addf %11, %13 : vector<8x896xf32>
    %15 = arith.negf %14 : vector<8x896xf32>
    %16 = math.exp %15 : vector<8x896xf32>
    %cst_11 = arith.constant 1.000000e+00 : f32
    %17 = vector.broadcast %cst_11 : f32 to vector<8x896xf32>
    %18 = arith.addf %17, %16 : vector<8x896xf32>
    %19 = arith.divf %17, %18 : vector<8x896xf32>
    %c0_12 = arith.constant 0 : index
    %c0_13 = arith.constant 0 : index
    %20 = vector.load %arg6[%c0_12, %c0_13] : memref<8x896xf32, #tpu.memory_space<vmem>>, vector<8x896xf32>
    tpu.vector_store %arg6[%c0_12, %c0_13], %19 {strides = array<i32>} : memref<8x896xf32, #tpu.memory_space<vmem>>, vector<8x896xf32>,
    return
  }
  func.func @transform_0(%arg0: i32) -> (i32, i32) {
    %c0_i32 = arith.constant 0 : i32
    %c0_i32_0 = arith.constant 0 : i32
    return %arg0, %c0_i32 : i32, i32
  }
  func.func @transform_1(%arg0: i32) -> (i32, i32) {
    %c0_i32 = arith.constant 0 : i32
    %c0_i32_0 = arith.constant 0 : i32
    %c0_i32_1 = arith.constant 0 : i32
    return %c0_i32, %c0_i32_0 : i32, i32
  }
  func.func @transform_2(%arg0: i32) -> (i32, i32) {
    %c0_i32 = arith.constant 0 : i32
    %c0_i32_0 = arith.constant 0 : i32
    %c0_i32_1 = arith.constant 0 : i32
    return %c0_i32, %c0_i32_0 : i32, i32
  }
  func.func @transform_3(%arg0: i32) -> (i32, i32) {
    %c0_i32 = arith.constant 0 : i32
    %c0_i32_0 = arith.constant 0 : i32
    %c0_i32_1 = arith.constant 0 : i32
    return %c0_i32, %c0_i32_0 : i32, i32
  }
  func.func @transform_4(%arg0: i32) -> (i32, i32) {
    %c0_i32 = arith.constant 0 : i32
    %c0_i32_0 = arith.constant 0 : i32
    %c0_i32_1 = arith.constant 0 : i32
    return %c0_i32, %c0_i32_0 : i32, i32
  }
  func.func @transform_5(%arg0: i32) -> (i32, i32) {
    %c0_i32 = arith.constant 0 : i32
    %c0_i32_0 = arith.constant 0 : i32
    return %arg0, %c0_i32 : i32, i32
  }
}

</mosaic_0001>

<llo_original>
// kernel: tpu_custom_call.1
$region0: #{tpu_custom_call.1}
  #allocation0 [shape = 'u32[]', space=smem, size = 0x4, offset = 0x4, fixed_abs, tag = 'smem constant byte address 0x4 - core index']
  #allocation1 [shape = 'u32[72,128]{1,0:T(1,128)}', space=vmem, size = 0x9000, scoped, tag = 'internal scratch']
  %s0 = inlined_call_operand.hbm [shape: f32[8,20], index: 0, kind: input, shape index: {}]
  %s1 = inlined_call_operand.hbm [shape: bf16[20,512], index: 1, kind: input, shape index: {}]
  %s2 = inlined_call_operand.hbm [shape: f32[1,512], index: 2, kind: input, shape index: {}]
  %s3 = inlined_call_operand.hbm [shape: bf16[512,896], index: 3, kind: input, shape index: {}]
  %s4 = inlined_call_operand.hbm [shape: f32[1,896], index: 4, kind: input, shape index: {}]
  %s5 = inlined_call_operand.hbm [shape: f32[8,896], index: 5, kind: output, shape index: {}]
  %s6 = sld [smem:[#allocation0]]
  $region50: #{tpu_custom_call.1} parent=0
    _
  %s8 = ssub.s32 1, %s6
  %s9 = scalar_select 0, %s8, %s6
  $region1: #{tpu_custom_call.1} parent=0
    #allocation2 [shape = 'u8[4096]{0}', space=vmem, size = 0x1000, scoped, tag = 'input window, operand 0, single buffered']
    #allocation3 [shape = 's32[1]{0}', space=sflag, size = 0x4, scoped, tag = 'scoped memory for tpu_custom_call.1']
    #allocation4 [shape = 's32[1]{0}', space=sflag, size = 0x4, scoped, tag = 'scoped memory for tpu_custom_call.1']
    #allocation5 [shape = 'u8[24576]{0}', space=vmem, size = 0x6000, scoped, tag = 'input window, operand 1, single buffered']
    #allocation6 [shape = 's32[1]{0}', space=sflag, size = 0x4, scoped, tag = 'scoped memory for tpu_custom_call.1']
    #allocation7 [shape = 'u8[2048]{0}', space=vmem, size = 0x800, scoped, tag = 'input window, operand 2, single buffered']
    #allocation8 [shape = 'u8[917504]{0}', space=vmem, size = 0xe0000, scoped, tag = 'input window, operand 3, single buffered']
    #allocation9 [shape = 's32[1]{0}', space=sflag, size = 0x4, scoped, tag = 'scoped memory for tpu_custom_call.1']
    #allocation10 [shape = 'u8[3584]{0}', space=vmem, size = 0x1000, scoped, tag = 'input window, operand 4, single buffered']
    #allocation11 [shape = 'u8[28672]{0}', space=vmem, size = 0x7000, scoped, tag = 'output window, operand 0, single buffered']
    %10 = vsyncpa [#allocation3], 0
    %11 = vsyncpa [#allocation6], 0
    %12 = vsyncpa [#allocation9], 0
    %13 = vsyncpa [#allocation4], 0
    // Predicated region
    $region2: #{tpu_custom_call.1} parent=1 // pred_check
      _
    $region3: #{tpu_custom_call.1} parent=1 // pred_check_branch
      %15 = sbr.rel (0) target = $region5
    $region4: #{tpu_custom_call.1} parent=1 // pred_region
      %17 = vsyncadd [#allocation3], 0
      %s19 = sshll.u32 %s0, 4
      %s20 = int_to_ptr.hbm [resolvable:$true] %s19
      %s21 = sshll.u32 [#allocation2], 4
      %s22 = int_to_ptr.vmem [resolvable:$true] %s21
      %24 = dma.hbm_to_vmem [thread:$0]  %s20, 128, %s22, [#allocation3]
    $region5: #{tpu_custom_call.1} parent=1 // pred_fallthru
      _
    // Predicated region
    $region6: #{tpu_custom_call.1} parent=1 // pred_check
      _
    $region7: #{tpu_custom_call.1} parent=1 // pred_check_branch
      %26 = sbr.rel (0) target = $region9
    $region8: #{tpu_custom_call.1} parent=1 // pred_region
      %28 = vsyncadd [#allocation6], 0
      %s29 = sshll.u32 %s1, 4
      %s30 = int_to_ptr.hbm [resolvable:$true] %s29
      %s31 = sshll.u32 [#allocation5], 4
      %s32 = int_to_ptr.vmem [resolvable:$true] %s31
      %37 = dma.hbm_to_vmem [thread:$0]  %s30, 768, %s32, [#allocation6], 256, 256, 16
    $region9: #{tpu_custom_call.1} parent=1 // pred_fallthru
      _
    // Predicated region
    $region10: #{tpu_custom_call.1} parent=1 // pred_check
      _
    $region11: #{tpu_custom_call.1} parent=1 // pred_check_branch
      %39 = sbr.rel (0) target = $region13
    $region12: #{tpu_custom_call.1} parent=1 // pred_region
      %41 = vsyncadd [#allocation6], 0
      %s43 = sshll.u32 %s2, 4
      %s44 = int_to_ptr.hbm [resolvable:$true] %s43
      %s45 = sshll.u32 [#allocation7], 4
      %s46 = int_to_ptr.vmem [resolvable:$true] %s45
      %48 = dma.hbm_to_vmem [thread:$0]  %s44, 64, %s46, [#allocation6]
    $region13: #{tpu_custom_call.1} parent=1 // pred_fallthru
      _
    // Predicated region
    $region14: #{tpu_custom_call.1} parent=1 // pred_check
      _
    $region15: #{tpu_custom_call.1} parent=1 // pred_check_branch
      %50 = sbr.rel (0) target = $region17
    $region16: #{tpu_custom_call.1} parent=1 // pred_region
      %52 = vsyncadd [#allocation9], 0
      %s53 = sshll.u32 %s3, 4
      %s54 = int_to_ptr.hbm [resolvable:$true] %s53
      %s55 = sshll.u32 [#allocation8], 4
      %s56 = int_to_ptr.vmem [resolvable:$true] %s55
      %61 = dma.hbm_to_vmem [thread:$0]  %s54, 28672, %s56, [#allocation9], 448, 448, 28
    $region17: #{tpu_custom_call.1} parent=1 // pred_fallthru
      _
    // Predicated region
    $region18: #{tpu_custom_call.1} parent=1 // pred_check
      _
    $region19: #{tpu_custom_call.1} parent=1 // pred_check_branch
      %63 = sbr.rel (0) target = $region21
    $region20: #{tpu_custom_call.1} parent=1 // pred_region
      %65 = vsyncadd [#allocation9], 0
      %s67 = sshll.u32 %s4, 4
      %s68 = int_to_ptr.hbm [resolvable:$true] %s67
      %s69 = sshll.u32 [#allocation10], 4
      %s70 = int_to_ptr.vmem [resolvable:$true] %s69
      %72 = dma.hbm_to_vmem [thread:$0]  %s68, 112, %s70, [#allocation9]
    $region21: #{tpu_custom_call.1} parent=1 // pred_fallthru
      _
    // Predicated region
    $region22: #{tpu_custom_call.1} parent=1 // pred_check
      _
    $region23: #{tpu_custom_call.1} parent=1 // pred_check_branch
      %74 = sbr.rel (0) target = $region25
    $region24: #{tpu_custom_call.1} parent=1 // pred_region
      %76 = dma.done [#allocation3], 128
    $region25: #{tpu_custom_call.1} parent=1 // pred_fallthru
      _
    // Predicated region
    $region26: #{tpu_custom_call.1} parent=1 // pred_check
      _
    $region27: #{tpu_custom_call.1} parent=1 // pred_check_branch
      %78 = sbr.rel (0) target = $region29
    $region28: #{tpu_custom_call.1} parent=1 // pred_region
      %80 = dma.done [#allocation6], 768
    $region29: #{tpu_custom_call.1} parent=1 // pred_fallthru
      _
    // Predicated region
    $region30: #{tpu_custom_call.1} parent=1 // pred_check
      _
    $region31: #{tpu_custom_call.1} parent=1 // pred_check_branch
      %82 = sbr.rel (0) target = $region33
    $region32: #{tpu_custom_call.1} parent=1 // pred_region
      %84 = dma.done [#allocation6], 64
    $region33: #{tpu_custom_call.1} parent=1 // pred_fallthru
      _
    // Predicated region
    $region34: #{tpu_custom_call.1} parent=1 // pred_check
      _
    $region35: #{tpu_custom_call.1} parent=1 // pred_check_branch
      %86 = sbr.rel (0) target = $region37
    $region36: #{tpu_custom_call.1} parent=1 // pred_region
      %88 = dma.done [#allocation9], 28672
    $region37: #{tpu_custom_call.1} parent=1 // pred_fallthru
      _
    // Predicated region
    $region38: #{tpu_custom_call.1} parent=1 // pred_check
      _
    $region39: #{tpu_custom_call.1} parent=1 // pred_check_branch
      %90 = sbr.rel (0) target = $region41
    $region40: #{tpu_custom_call.1} parent=1 // pred_region
      %92 = dma.done [#allocation9], 112
    $region41: #{tpu_custom_call.1} parent=1 // pred_fallthru
      _
    %v94 = vld [vmem:[#allocation2] sm:$0xff]
    %v95 = vpack.c.bf16 %v94, %v94
    %v96 = vld [vmem:[#allocation5] sm:$0xff]
    %v97 = vld [vmem:[#allocation5 + $0x8] sm:$0xff]
    %v98 = vld [vmem:[#allocation5 + $0x10] sm:$0xff]
    %v99 = vld [vmem:[#allocation5 + $0x18] sm:$0xff]
    %v100 = vld [vmem:[#allocation5 + $0x20] sm:$0x33]
    %v101 = vld [vmem:[#allocation5 + $0x28] sm:$0x33]
    %v102 = vld [vmem:[#allocation7] sm:$0xf]
    %v104 = vperm.slane %v102, 0
    %v105 = vperm.slane %v102, 1
    %v106 = vperm.slane %v102, 2
    %v107 = vperm.slane %v102, 3
    %v118 = vunpack.c.l.b16 %v96
    %v119 = vunpack.c.h.b16 %v96
    %v120 = vunpack.c.l.b16 %v97
    %v121 = vunpack.c.h.b16 %v97
    %v122 = vunpack.c.l.b16 %v98
    %v123 = vunpack.c.h.b16 %v98
    %v124 = vunpack.c.l.b16 %v99
    %v125 = vunpack.c.h.b16 %v99
    %v126 = vunpack.c.l.b16 %v100
    %v127 = vunpack.c.h.b16 %v100
    %v128 = vunpack.c.l.b16 %v101
    %v129 = vunpack.c.h.b16 %v101
    %v130 = vpack.c.b16 %v122, %v118
    %v131 = vpack.c.b16 %v123, %v119
    %v132 = vpack.c.b16 %v124, %v120
    %v133 = vpack.c.b16 %v125, %v121
    %v134 = vpack.c.b16 %v126, %v126
    %v135 = vpack.c.b16 %v127, %v127
    %v136 = vpack.c.b16 %v128, %v128
    %v137 = vpack.c.b16 %v129, %v129
    %vm142 = vcmask 162816
    %v144 = vsel %vm142, %v95, 0
    %vm146 = vcmask 1041408
    %v148 = vsel %vm146, %v134, 0
    %v151 = vsel %vm146, %v135, 0
    %v154 = vsel %vm146, %v136, 0
    %v157 = vsel %vm146, %v137, 0
    %159 = vmatpush.bf16.msra.mxu0 0
    %160 = vmatpush.bf16.msra.mxu0 0
    %161 = vmatpush.bf16.msra.mxu0 0
    %162 = vmatpush.bf16.msra.mxu0 0
    %163 = vmatpush.bf16.msra.mxu0 0
    %164 = vmatpush.bf16.msra.mxu0 0
    %165 = vmatpush.bf16.msra.mxu0 %v148
    %166 = vmatpush.bf16.msra.mxu0 %v130
    %167 = vmatmul.bf16.gmra.mxu0 %v144
    %v168 = vpop.f32.mrf.mxu0
    %v169 = vadd.f32 %v104, %v168
    %v170 = vpop.f32.mrf.mxu0
    %171 = vdwg.mxu0
    %172 = vmatpush.bf16.msra.mxu0 0
    %173 = vmatpush.bf16.msra.mxu0 0
    %174 = vmatpush.bf16.msra.mxu0 0
    %175 = vmatpush.bf16.msra.mxu0 0
    %176 = vmatpush.bf16.msra.mxu0 0
    %177 = vmatpush.bf16.msra.mxu0 0
    %178 = vmatpush.bf16.msra.mxu0 %v151
    %179 = vmatpush.bf16.msra.mxu0 %v131
    %180 = vmatmul.bf16.gmra.mxu0 %v144
    %v181 = vpop.f32.mrf.mxu0
    %v182 = vadd.f32 %v105, %v181
    %v183 = vpop.f32.mrf.mxu0
    %184 = vdwg.mxu0
    %185 = vmatpush.bf16.msra.mxu0 0
    %186 = vmatpush.bf16.msra.mxu0 0
    %187 = vmatpush.bf16.msra.mxu0 0
    %188 = vmatpush.bf16.msra.mxu0 0
    %189 = vmatpush.bf16.msra.mxu0 0
    %190 = vmatpush.bf16.msra.mxu0 0
    %191 = vmatpush.bf16.msra.mxu0 %v154
    %192 = vmatpush.bf16.msra.mxu0 %v132
    %193 = vmatmul.bf16.gmra.mxu0 %v144
    %v194 = vpop.f32.mrf.mxu0
    %v195 = vadd.f32 %v106, %v194
    %v196 = vpop.f32.mrf.mxu0
    %197 = vdwg.mxu0
    %198 = vmatpush.bf16.msra.mxu0 0
    %199 = vmatpush.bf16.msra.mxu0 0
    %200 = vmatpush.bf16.msra.mxu0 0
    %201 = vmatpush.bf16.msra.mxu0 0
    %202 = vmatpush.bf16.msra.mxu0 0
    %203 = vmatpush.bf16.msra.mxu0 0
    %204 = vmatpush.bf16.msra.mxu0 %v157
    %205 = vmatpush.bf16.msra.mxu0 %v133
    %206 = vmatmul.bf16.gmra.mxu0 %v144
    %v207 = vpop.f32.mrf.mxu0
    %v208 = vadd.f32 %v107, %v207
    %v209 = vpop.f32.mrf.mxu0
    %210 = vdwg.mxu0
    %v211 = vmax.f32 %v169, 0.0
    %v212 = vmax.f32 %v182, 0.0
    %v213 = vmax.f32 %v195, 0.0
    %v214 = vmax.f32 %v208, 0.0
    %v215 = vpack.c.bf16 %v211, %v211
    %v216 = vpack.c.bf16 %v212, %v212
    %v217 = vpack.c.bf16 %v213, %v213
    %v218 = vpack.c.bf16 %v214, %v214
    %v219 = vld [vmem:[#allocation8] sm:$0xff]
    %v220 = vld [vmem:[#allocation8 + $0x8] sm:$0xff]
    %v221 = vld [vmem:[#allocation8 + $0x10] sm:$0xff]
    %v222 = vld [vmem:[#allocation8 + $0x18] sm:$0xf]
    %v223 = vld [vmem:[#allocation8 + $0x1c] sm:$0xff]
    %v224 = vld [vmem:[#allocation8 + $0x24] sm:$0xff]
    %v225 = vld [vmem:[#allocation8 + $0x2c] sm:$0xff]
    %v226 = vld [vmem:[#allocation8 + $0x34] sm:$0xf]
    %v227 = vld [vmem:[#allocation8 + $0x38] sm:$0xff]
    %v228 = vld [vmem:[#allocation8 + $0x40] sm:$0xff]
    %v229 = vld [vmem:[#allocation8 + $0x48] sm:$0xff]
    %v230 = vld [vmem:[#allocation8 + $0x50] sm:$0xf]
    %v231 = vld [vmem:[#allocation8 + $0x54] sm:$0xff]
    %v232 = vld [vmem:[#allocation8 + $0x5c] sm:$0xff]
    %v233 = vld [vmem:[#allocation8 + $0x64] sm:$0xff]
    %v234 = vld [vmem:[#allocation8 + $0x6c] sm:$0xf]
    %v235 = vld [vmem:[#allocation8 + $0x70] sm:$0xff]
    %v236 = vld [vmem:[#allocation8 + $0x78] sm:$0xff]
    %v237 = vld [vmem:[#allocation8 + $0x80] sm:$0xff]
    %v238 = vld [vmem:[#allocation8 + $0x88] sm:$0xf]
    %v239 = vld [vmem:[#allocation8 + $0x8c] sm:$0xff]
    %v240 = vld [vmem:[#allocation8 + $0x94] sm:$0xff]
    %v241 = vld [vmem:[#allocation8 + $0x9c] sm:$0xff]
    %v242 = vld [vmem:[#allocation8 + $0xa4] sm:$0xf]
    %v243 = vld [vmem:[#allocation8 + $0xa8] sm:$0xff]
    %v244 = vld [vmem:[#allocation8 + $0xb0] sm:$0xff]
    %v245 = vld [vmem:[#allocation8 + $0xb8] sm:$0xff]
    %v246 = vld [vmem:[#allocation8 + $0xc0] sm:$0xf]
    %v247 = vld [vmem:[#allocation8 + $0xc4] sm:$0xff]
    %v248 = vld [vmem:[#allocation8 + $0xcc] sm:$0xff]
    %v249 = vld [vmem:[#allocation8 + $0xd4] sm:$0xff]
    %v250 = vld [vmem:[#allocation8 + $0xdc] sm:$0xf]
    %v251 = vld [vmem:[#allocation8 + $0xe0] sm:$0xff]
    %v252 = vld [vmem:[#allocation8 + $0xe8] sm:$0xff]
    %v253 = vld [vmem:[#allocation8 + $0xf0] sm:$0xff]
    %v254 = vld [vmem:[#allocation8 + $0xf8] sm:$0xf]
    %v255 = vld [vmem:[#allocation8 + $0xfc] sm:$0xff]
    %v256 = vld [vmem:[#allocation8 + $0x104] sm:$0xff]
    %v257 = vld [vmem:[#allocation8 + $0x10c] sm:$0xff]
    %v258 = vld [vmem:[#allocation8 + $0x114] sm:$0xf]
    %v259 = vld [vmem:[#allocation8 + $0x118] sm:$0xff]
    %v260 = vld [vmem:[#allocation8 + $0x120] sm:$0xff]
    %v261 = vld [vmem:[#allocation8 + $0x128] sm:$0xff]
    %v262 = vld [vmem:[#allocation8 + $0x130] sm:$0xf]
    %v263 = vld [vmem:[#allocation8 + $0x134] sm:$0xff]
    %v264 = vld [vmem:[#allocation8 + $0x13c] sm:$0xff]
    %v265 = vld [vmem:[#allocation8 + $0x144] sm:$0xff]
    %v266 = vld [vmem:[#allocation8 + $0x14c] sm:$0xf]
    %v267 = vld [vmem:[#allocation8 + $0x150] sm:$0xff]
    %v268 = vld [vmem:[#allocation8 + $0x158] sm:$0xff]
    %v269 = vld [vmem:[#allocation8 + $0x160] sm:$0xff]
    %v270 = vld [vmem:[#allocation8 + $0x168] sm:$0xf]
    %v271 = vld [vmem:[#allocation8 + $0x16c] sm:$0xff]
    %v272 = vld [vmem:[#allocation8 + $0x174] sm:$0xff]
    %v273 = vld [vmem:[#allocation8 + $0x17c] sm:$0xff]
    %v274 = vld [vmem:[#allocation8 + $0x184] sm:$0xf]
    %v275 = vld [vmem:[#allocation8 + $0x188] sm:$0xff]
    %v276 = vld [vmem:[#allocation8 + $0x190] sm:$0xff]
    %v277 = vld [vmem:[#allocation8 + $0x198] sm:$0xff]
    %v278 = vld [vmem:[#allocation8 + $0x1a0] sm:$0xf]
    %v279 = vld [vmem:[#allocation8 + $0x1a4] sm:$0xff]
    %v280 = vld [vmem:[#allocation8 + $0x1ac] sm:$0xff]
    %v281 = vld [vmem:[#allocation8 + $0x1b4] sm:$0xff]
    %v282 = vld [vmem:[#allocation8 + $0x1bc] sm:$0xf]
    %v283 = vld [vmem:[#allocation8 + $0x1c0] sm:$0xff]
    %v284 = vld [vmem:[#allocation8 + $0x1c8] sm:$0xff]
    %v285 = vld [vmem:[#allocation8 + $0x1d0] sm:$0xff]
    %v286 = vld [vmem:[#allocation8 + $0x1d8] sm:$0xf]
    %v287 = vld [vmem:[#allocation8 + $0x1dc] sm:$0xff]
    %v288 = vld [vmem:[#allocation8 + $0x1e4] sm:$0xff]
    %v289 = vld [vmem:[#allocation8 + $0x1ec] sm:$0xff]
    %v290 = vld [vmem:[#allocation8 + $0x1f4] sm:$0xf]
    %v291 = vld [vmem:[#allocation8 + $0x1f8] sm:$0xff]
    %v292 = vld [vmem:[#allocation8 + $0x200] sm:$0xff]
    %v293 = vld [vmem:[#allocation8 + $0x208] sm:$0xff]
    %v294 = vld [vmem:[#allocation8 + $0x210] sm:$0xf]
    %v295 = vld [vmem:[#allocation8 + $0x214] sm:$0xff]
    %v296 = vld [vmem:[#allocation8 + $0x21c] sm:$0xff]
    %v297 = vld [vmem:[#allocation8 + $0x224] sm:$0xff]
    %v298 = vld [vmem:[#allocation8 + $0x22c] sm:$0xf]
    %v299 = vld [vmem:[#allocation8 + $0x230] sm:$0xff]
    %v300 = vld [vmem:[#allocation8 + $0x238] sm:$0xff]
    %v301 = vld [vmem:[#allocation8 + $0x240] sm:$0xff]
    %v302 = vld [vmem:[#allocation8 + $0x248] sm:$0xf]
    %v303 = vld [vmem:[#allocation8 + $0x24c] sm:$0xff]
    %v304 = vld [vmem:[#allocation8 + $0x254] sm:$0xff]
    %v305 = vld [vmem:[#allocation8 + $0x25c] sm:$0xff]
    %v306 = vld [vmem:[#allocation8 + $0x264] sm:$0xf]
    %v307 = vld [vmem:[#allocation8 + $0x268] sm:$0xff]
    %v308 = vld [vmem:[#allocation8 + $0x270] sm:$0xff]
    %v309 = vld [vmem:[#allocation8 + $0x278] sm:$0xff]
    %v310 = vld [vmem:[#allocation8 + $0x280] sm:$0xf]
    %v311 = vld [vmem:[#allocation8 + $0x284] sm:$0xff]
    %v312 = vld [vmem:[#allocation8 + $0x28c] sm:$0xff]
    %v313 = vld [vmem:[#allocation8 + $0x294] sm:$0xff]
    %v314 = vld [vmem:[#allocation8 + $0x29c] sm:$0xf]
    %v315 = vld [vmem:[#allocation8 + $0x2a0] sm:$0xff]
    %v316 = vld [vmem:[#allocation8 + $0x2a8] sm:$0xff]
    %v317 = vld [vmem:[#allocation8 + $0x2b0] sm:$0xff]
    %v318 = vld [vmem:[#allocation8 + $0x2b8] sm:$0xf]
    %v319 = vld [vmem:[#allocation8 + $0x2bc] sm:$0xff]
    %v320 = vld [vmem:[#allocation8 + $0x2c4] sm:$0xff]
    %v321 = vld [vmem:[#allocation8 + $0x2cc] sm:$0xff]
    %v322 = vld [vmem:[#allocation8 + $0x2d4] sm:$0xf]
    %v323 = vld [vmem:[#allocation8 + $0x2d8] sm:$0xff]
    %v324 = vld [vmem:[#allocation8 + $0x2e0] sm:$0xff]
    %v325 = vld [vmem:[#allocation8 + $0x2e8] sm:$0xff]
    %v326 = vld [vmem:[#allocation8 + $0x2f0] sm:$0xf]
    %v327 = vld [vmem:[#allocation8 + $0x2f4] sm:$0xff]
    %v328 = vld [vmem:[#allocation8 + $0x2fc] sm:$0xff]
    %v329 = vld [vmem:[#allocation8 + $0x304] sm:$0xff]
    %v330 = vld [vmem:[#allocation8 + $0x30c] sm:$0xf]
    %v331 = vld [vmem:[#allocation8 + $0x310] sm:$0xff]
    %v332 = vld [vmem:[#allocation8 + $0x318] sm:$0xff]
    %v333 = vld [vmem:[#allocation8 + $0x320] sm:$0xff]
    %v334 = vld [vmem:[#allocation8 + $0x328] sm:$0xf]
    %v335 = vld [vmem:[#allocation8 + $0x32c] sm:$0xff]
    %v336 = vld [vmem:[#allocation8 + $0x334] sm:$0xff]
    %v337 = vld [vmem:[#allocation8 + $0x33c] sm:$0xff]
    %v338 = vld [vmem:[#allocation8 + $0x344] sm:$0xf]
    %v339 = vld [vmem:[#allocation8 + $0x348] sm:$0xff]
    %v340 = vld [vmem:[#allocation8 + $0x350] sm:$0xff]
    %v341 = vld [vmem:[#allocation8 + $0x358] sm:$0xff]
    %v342 = vld [vmem:[#allocation8 + $0x360] sm:$0xf]
    %v343 = vld [vmem:[#allocation8 + $0x364] sm:$0xff]
    %v344 = vld [vmem:[#allocation8 + $0x36c] sm:$0xff]
    %v345 = vld [vmem:[#allocation8 + $0x374] sm:$0xff]
    %v346 = vld [vmem:[#allocation8 + $0x37c] sm:$0xf]
    %v347 = vld [vmem:[#allocation8 + $0x380] sm:$0xff]
    %v348 = vld [vmem:[#allocation8 + $0x388] sm:$0xff]
    %v349 = vld [vmem:[#allocation8 + $0x390] sm:$0xff]
    %v350 = vld [vmem:[#allocation8 + $0x398] sm:$0xf]
    %v351 = vld [vmem:[#allocation8 + $0x39c] sm:$0xff]
    %v352 = vld [vmem:[#allocation8 + $0x3a4] sm:$0xff]
    %v353 = vld [vmem:[#allocation8 + $0x3ac] sm:$0xff]
    %v354 = vld [vmem:[#allocation8 + $0x3b4] sm:$0xf]
    %v355 = vld [vmem:[#allocation8 + $0x3b8] sm:$0xff]
    %v356 = vld [vmem:[#allocation8 + $0x3c0] sm:$0xff]
    %v357 = vld [vmem:[#allocation8 + $0x3c8] sm:$0xff]
    %v358 = vld [vmem:[#allocation8 + $0x3d0] sm:$0xf]
    %v359 = vld [vmem:[#allocation8 + $0x3d4] sm:$0xff]
    %v360 = vld [vmem:[#allocation8 + $0x3dc] sm:$0xff]
    %v361 = vld [vmem:[#allocation8 + $0x3e4] sm:$0xff]
    %v362 = vld [vmem:[#allocation8 + $0x3ec] sm:$0xf]
    %v363 = vld [vmem:[#allocation8 + $0x3f0] sm:$0xff]
    %v364 = vld [vmem:[#allocation8 + $0x3f8] sm:$0xff]
    %v365 = vld [vmem:[#allocation8 + $0x400] sm:$0xff]
    %v366 = vld [vmem:[#allocation8 + $0x408] sm:$0xf]
    %v367 = vld [vmem:[#allocation8 + $0x40c] sm:$0xff]
    %v368 = vld [vmem:[#allocation8 + $0x414] sm:$0xff]
    %v369 = vld [vmem:[#allocation8 + $0x41c] sm:$0xff]
    %v370 = vld [vmem:[#allocation8 + $0x424] sm:$0xf]
    %v371 = vld [vmem:[#allocation8 + $0x428] sm:$0xff]
    %v372 = vld [vmem:[#allocation8 + $0x430] sm:$0xff]
    %v373 = vld [vmem:[#allocation8 + $0x438] sm:$0xff]
    %v374 = vld [vmem:[#allocation8 + $0x440] sm:$0xf]
    %v375 = vld [vmem:[#allocation8 + $0x444] sm:$0xff]
    %v376 = vld [vmem:[#allocation8 + $0x44c] sm:$0xff]
    %v377 = vld [vmem:[#allocation8 + $0x454] sm:$0xff]
    %v378 = vld [vmem:[#allocation8 + $0x45c] sm:$0xf]
    %v379 = vld [vmem:[#allocation8 + $0x460] sm:$0xff]
    %v380 = vld [vmem:[#allocation8 + $0x468] sm:$0xff]
    %v381 = vld [vmem:[#allocation8 + $0x470] sm:$0xff]
    %v382 = vld [vmem:[#allocation8 + $0x478] sm:$0xf]
    %v383 = vld [vmem:[#allocation8 + $0x47c] sm:$0xff]
    %v384 = vld [vmem:[#allocation8 + $0x484] sm:$0xff]
    %v385 = vld [vmem:[#allocation8 + $0x48c] sm:$0xff]
    %v386 = vld [vmem:[#allocation8 + $0x494] sm:$0xf]
    %v387 = vld [vmem:[#allocation8 + $0x498] sm:$0xff]
    %v388 = vld [vmem:[#allocation8 + $0x4a0] sm:$0xff]
    %v389 = vld [vmem:[#allocation8 + $0x4a8] sm:$0xff]
    %v390 = vld [vmem:[#allocation8 + $0x4b0] sm:$0xf]
    %v391 = vld [vmem:[#allocation8 + $0x4b4] sm:$0xff]
    %v392 = vld [vmem:[#allocation8 + $0x4bc] sm:$0xff]
    %v393 = vld [vmem:[#allocation8 + $0x4c4] sm:$0xff]
    %v394 = vld [vmem:[#allocation8 + $0x4cc] sm:$0xf]
    %v395 = vld [vmem:[#allocation8 + $0x4d0] sm:$0xff]
    %v396 = vld [vmem:[#allocation8 + $0x4d8] sm:$0xff]
    %v397 = vld [vmem:[#allocation8 + $0x4e0] sm:$0xff]
    %v398 = vld [vmem:[#allocation8 + $0x4e8] sm:$0xf]
    %v399 = vld [vmem:[#allocation8 + $0x4ec] sm:$0xff]
    %v400 = vld [vmem:[#allocation8 + $0x4f4] sm:$0xff]
    %v401 = vld [vmem:[#allocation8 + $0x4fc] sm:$0xff]
    %v402 = vld [vmem:[#allocation8 + $0x504] sm:$0xf]
    %v403 = vld [vmem:[#allocation8 + $0x508] sm:$0xff]
    %v404 = vld [vmem:[#allocation8 + $0x510] sm:$0xff]
    %v405 = vld [vmem:[#allocation8 + $0x518] sm:$0xff]
    %v406 = vld [vmem:[#allocation8 + $0x520] sm:$0xf]
    %v407 = vld [vmem:[#allocation8 + $0x524] sm:$0xff]
    %v408 = vld [vmem:[#allocation8 + $0x52c] sm:$0xff]
    %v409 = vld [vmem:[#allocation8 + $0x534] sm:$0xff]
    %v410 = vld [vmem:[#allocation8 + $0x53c] sm:$0xf]
    %v411 = vld [vmem:[#allocation8 + $0x540] sm:$0xff]
    %v412 = vld [vmem:[#allocation8 + $0x548] sm:$0xff]
    %v413 = vld [vmem:[#allocation8 + $0x550] sm:$0xff]
    %v414 = vld [vmem:[#allocation8 + $0x558] sm:$0xf]
    %v415 = vld [vmem:[#allocation8 + $0x55c] sm:$0xff]
    %v416 = vld [vmem:[#allocation8 + $0x564] sm:$0xff]
    %v417 = vld [vmem:[#allocation8 + $0x56c] sm:$0xff]
    %v418 = vld [vmem:[#allocation8 + $0x574] sm:$0xf]
    %v419 = vld [vmem:[#allocation8 + $0x578] sm:$0xff]
    %v420 = vld [vmem:[#allocation8 + $0x580] sm:$0xff]
    %v421 = vld [vmem:[#allocation8 + $0x588] sm:$0xff]
    %v422 = vld [vmem:[#allocation8 + $0x590] sm:$0xf]
    %v423 = vld [vmem:[#allocation8 + $0x594] sm:$0xff]
    %v424 = vld [vmem:[#allocation8 + $0x59c] sm:$0xff]
    %v425 = vld [vmem:[#allocation8 + $0x5a4] sm:$0xff]
    %v426 = vld [vmem:[#allocation8 + $0x5ac] sm:$0xf]
    %v427 = vld [vmem:[#allocation8 + $0x5b0] sm:$0xff]
    %v428 = vld [vmem:[#allocation8 + $0x5b8] sm:$0xff]
    %v429 = vld [vmem:[#allocation8 + $0x5c0] sm:$0xff]
    %v430 = vld [vmem:[#allocation8 + $0x5c8] sm:$0xf]
    %v431 = vld [vmem:[#allocation8 + $0x5cc] sm:$0xff]
    %v432 = vld [vmem:[#allocation8 + $0x5d4] sm:$0xff]
    %v433 = vld [vmem:[#allocation8 + $0x5dc] sm:$0xff]
    %v434 = vld [vmem:[#allocation8 + $0x5e4] sm:$0xf]
    %v435 = vld [vmem:[#allocation8 + $0x5e8] sm:$0xff]
    %v436 = vld [vmem:[#allocation8 + $0x5f0] sm:$0xff]
    %v437 = vld [vmem:[#allocation8 + $0x5f8] sm:$0xff]
    %v438 = vld [vmem:[#allocation8 + $0x600] sm:$0xf]
    %v439 = vld [vmem:[#allocation8 + $0x604] sm:$0xff]
    %v440 = vld [vmem:[#allocation8 + $0x60c] sm:$0xff]
    %v441 = vld [vmem:[#allocation8 + $0x614] sm:$0xff]
    %v442 = vld [vmem:[#allocation8 + $0x61c] sm:$0xf]
    %v443 = vld [vmem:[#allocation8 + $0x620] sm:$0xff]
    %v444 = vld [vmem:[#allocation8 + $0x628] sm:$0xff]
    %v445 = vld [vmem:[#allocation8 + $0x630] sm:$0xff]
    %v446 = vld [vmem:[#allocation8 + $0x638] sm:$0xf]
    %v447 = vld [vmem:[#allocation8 + $0x63c] sm:$0xff]
    %v448 = vld [vmem:[#allocation8 + $0x644] sm:$0xff]
    %v449 = vld [vmem:[#allocation8 + $0x64c] sm:$0xff]
    %v450 = vld [vmem:[#allocation8 + $0x654] sm:$0xf]
    %v451 = vld [vmem:[#allocation8 + $0x658] sm:$0xff]
    %v452 = vld [vmem:[#allocation8 + $0x660] sm:$0xff]
    %v453 = vld [vmem:[#allocation8 + $0x668] sm:$0xff]
    %v454 = vld [vmem:[#allocation8 + $0x670] sm:$0xf]
    %v455 = vld [vmem:[#allocation8 + $0x674] sm:$0xff]
    %v456 = vld [vmem:[#allocation8 + $0x67c] sm:$0xff]
    %v457 = vld [vmem:[#allocation8 + $0x684] sm:$0xff]
    %v458 = vld [vmem:[#allocation8 + $0x68c] sm:$0xf]
    %v459 = vld [vmem:[#allocation8 + $0x690] sm:$0xff]
    %v460 = vld [vmem:[#allocation8 + $0x698] sm:$0xff]
    %v461 = vld [vmem:[#allocation8 + $0x6a0] sm:$0xff]
    %v462 = vld [vmem:[#allocation8 + $0x6a8] sm:$0xf]
    %v463 = vld [vmem:[#allocation8 + $0x6ac] sm:$0xff]
    %v464 = vld [vmem:[#allocation8 + $0x6b4] sm:$0xff]
    %v465 = vld [vmem:[#allocation8 + $0x6bc] sm:$0xff]
    %v466 = vld [vmem:[#allocation8 + $0x6c4] sm:$0xf]
    %v467 = vld [vmem:[#allocation8 + $0x6c8] sm:$0xff]
    %v468 = vld [vmem:[#allocation8 + $0x6d0] sm:$0xff]
    %v469 = vld [vmem:[#allocation8 + $0x6d8] sm:$0xff]
    %v470 = vld [vmem:[#allocation8 + $0x6e0] sm:$0xf]
    %v471 = vld [vmem:[#allocation8 + $0x6e4] sm:$0xff]
    %v472 = vld [vmem:[#allocation8 + $0x6ec] sm:$0xff]
    %v473 = vld [vmem:[#allocation8 + $0x6f4] sm:$0xff]
    %v474 = vld [vmem:[#allocation8 + $0x6fc] sm:$0xf]
    %v475 = vld [vmem:[#allocation10] sm:$0xff]
    %v477 = vperm.slane %v475, 0
    %v478 = vperm.slane %v475, 1
    %v479 = vperm.slane %v475, 2
    %v480 = vperm.slane %v475, 3
    %v481 = vperm.slane %v475, 4
    %v482 = vperm.slane %v475, 5
    %v483 = vperm.slane %v475, 6
    %v747 = vunpack.c.l.b16 %v219
    %v748 = vunpack.c.h.b16 %v219
    %v749 = vunpack.c.l.b16 %v220
    %v750 = vunpack.c.h.b16 %v220
    %v751 = vunpack.c.l.b16 %v221
    %v752 = vunpack.c.h.b16 %v221
    %v753 = vunpack.c.l.b16 %v222
    %v754 = vunpack.c.l.b16 %v223
    %v755 = vunpack.c.h.b16 %v223
    %v756 = vunpack.c.l.b16 %v224
    %v757 = vunpack.c.h.b16 %v224
    %v758 = vunpack.c.l.b16 %v225
    %v759 = vunpack.c.h.b16 %v225
    %v760 = vunpack.c.l.b16 %v226
    %v761 = vunpack.c.l.b16 %v227
    %v762 = vunpack.c.h.b16 %v227
    %v763 = vunpack.c.l.b16 %v228
    %v764 = vunpack.c.h.b16 %v228
    %v765 = vunpack.c.l.b16 %v229
    %v766 = vunpack.c.h.b16 %v229
    %v767 = vunpack.c.l.b16 %v230
    %v768 = vunpack.c.l.b16 %v231
    %v769 = vunpack.c.h.b16 %v231
    %v770 = vunpack.c.l.b16 %v232
    %v771 = vunpack.c.h.b16 %v232
    %v772 = vunpack.c.l.b16 %v233
    %v773 = vunpack.c.h.b16 %v233
    %v774 = vunpack.c.l.b16 %v234
    %v775 = vunpack.c.l.b16 %v235
    %v776 = vunpack.c.h.b16 %v235
    %v777 = vunpack.c.l.b16 %v236
    %v778 = vunpack.c.h.b16 %v236
    %v779 = vunpack.c.l.b16 %v237
    %v780 = vunpack.c.h.b16 %v237
    %v781 = vunpack.c.l.b16 %v238
    %v782 = vunpack.c.l.b16 %v239
    %v783 = vunpack.c.h.b16 %v239
    %v784 = vunpack.c.l.b16 %v240
    %v785 = vunpack.c.h.b16 %v240
    %v786 = vunpack.c.l.b16 %v241
    %v787 = vunpack.c.h.b16 %v241
    %v788 = vunpack.c.l.b16 %v242
    %v789 = vunpack.c.l.b16 %v243
    %v790 = vunpack.c.h.b16 %v243
    %v791 = vunpack.c.l.b16 %v244
    %v792 = vunpack.c.h.b16 %v244
    %v793 = vunpack.c.l.b16 %v245
    %v794 = vunpack.c.h.b16 %v245
    %v795 = vunpack.c.l.b16 %v246
    %v796 = vunpack.c.l.b16 %v247
    %v797 = vunpack.c.h.b16 %v247
    %v798 = vunpack.c.l.b16 %v248
    %v799 = vunpack.c.h.b16 %v248
    %v800 = vunpack.c.l.b16 %v249
    %v801 = vunpack.c.h.b16 %v249
    %v802 = vunpack.c.l.b16 %v250
    %v803 = vunpack.c.l.b16 %v251
    %v804 = vunpack.c.h.b16 %v251
    %v805 = vunpack.c.l.b16 %v252
    %v806 = vunpack.c.h.b16 %v252
    %v807 = vunpack.c.l.b16 %v253
    %v808 = vunpack.c.h.b16 %v253
    %v809 = vunpack.c.l.b16 %v254
    %v810 = vunpack.c.l.b16 %v255
    %v811 = vunpack.c.h.b16 %v255
    %v812 = vunpack.c.l.b16 %v256
    %v813 = vunpack.c.h.b16 %v256
    %v814 = vunpack.c.l.b16 %v257
    %v815 = vunpack.c.h.b16 %v257
    %v816 = vunpack.c.l.b16 %v258
    %v817 = vunpack.c.l.b16 %v259
    %v818 = vunpack.c.h.b16 %v259
    %v819 = vunpack.c.l.b16 %v260
    %v820 = vunpack.c.h.b16 %v260
    %v821 = vunpack.c.l.b16 %v261
    %v822 = vunpack.c.h.b16 %v261
    %v823 = vunpack.c.l.b16 %v262
    %v824 = vunpack.c.l.b16 %v263
    %v825 = vunpack.c.h.b16 %v263
    %v826 = vunpack.c.l.b16 %v264
    %v827 = vunpack.c.h.b16 %v264
    %v828 = vunpack.c.l.b16 %v265
    %v829 = vunpack.c.h.b16 %v265
    %v830 = vunpack.c.l.b16 %v266
    %v831 = vunpack.c.l.b16 %v267
    %v832 = vunpack.c.h.b16 %v267
    %v833 = vunpack.c.l.b16 %v268
    %v834 = vunpack.c.h.b16 %v268
    %v835 = vunpack.c.l.b16 %v269
    %v836 = vunpack.c.h.b16 %v269
    %v837 = vunpack.c.l.b16 %v270
    %v838 = vunpack.c.l.b16 %v271
    %v839 = vunpack.c.h.b16 %v271
    %v840 = vunpack.c.l.b16 %v272
    %v841 = vunpack.c.h.b16 %v272
    %v842 = vunpack.c.l.b16 %v273
    %v843 = vunpack.c.h.b16 %v273
    %v844 = vunpack.c.l.b16 %v274
    %v845 = vunpack.c.l.b16 %v275
    %v846 = vunpack.c.h.b16 %v275
    %v847 = vunpack.c.l.b16 %v276
    %v848 = vunpack.c.h.b16 %v276
    %v849 = vunpack.c.l.b16 %v277
    %v850 = vunpack.c.h.b16 %v277
    %v851 = vunpack.c.l.b16 %v278
    %v852 = vunpack.c.l.b16 %v279
    %v853 = vunpack.c.h.b16 %v279
    %v854 = vunpack.c.l.b16 %v280
    %v855 = vunpack.c.h.b16 %v280
    %v856 = vunpack.c.l.b16 %v281
    %v857 = vunpack.c.h.b16 %v281
    %v858 = vunpack.c.l.b16 %v282
    %v859 = vunpack.c.l.b16 %v283
    %v860 = vunpack.c.h.b16 %v283
    %v861 = vunpack.c.l.b16 %v284
    %v862 = vunpack.c.h.b16 %v284
    %v863 = vunpack.c.l.b16 %v285
    %v864 = vunpack.c.h.b16 %v285
    %v865 = vunpack.c.l.b16 %v286
    %v866 = vunpack.c.l.b16 %v287
    %v867 = vunpack.c.h.b16 %v287
    %v868 = vunpack.c.l.b16 %v288
    %v869 = vunpack.c.h.b16 %v288
    %v870 = vunpack.c.l.b16 %v289
    %v871 = vunpack.c.h.b16 %v289
    %v872 = vunpack.c.l.b16 %v290
    %v873 = vunpack.c.l.b16 %v291
    %v874 = vunpack.c.h.b16 %v291
    %v875 = vunpack.c.l.b16 %v292
    %v876 = vunpack.c.h.b16 %v292
    %v877 = vunpack.c.l.b16 %v293
    %v878 = vunpack.c.h.b16 %v293
    %v879 = vunpack.c.l.b16 %v294
    %v880 = vunpack.c.l.b16 %v295
    %v881 = vunpack.c.h.b16 %v295
    %v882 = vunpack.c.l.b16 %v296
    %v883 = vunpack.c.h.b16 %v296
    %v884 = vunpack.c.l.b16 %v297
    %v885 = vunpack.c.h.b16 %v297
    %v886 = vunpack.c.l.b16 %v298
    %v887 = vunpack.c.l.b16 %v299
    %v888 = vunpack.c.h.b16 %v299
    %v889 = vunpack.c.l.b16 %v300
    %v890 = vunpack.c.h.b16 %v300
    %v891 = vunpack.c.l.b16 %v301
    %v892 = vunpack.c.h.b16 %v301
    %v893 = vunpack.c.l.b16 %v302
    %v894 = vunpack.c.l.b16 %v303
    %v895 = vunpack.c.h.b16 %v303
    %v896 = vunpack.c.l.b16 %v304
    %v897 = vunpack.c.h.b16 %v304
    %v898 = vunpack.c.l.b16 %v305
    %v899 = vunpack.c.h.b16 %v305
    %v900 = vunpack.c.l.b16 %v306
    %v901 = vunpack.c.l.b16 %v307
    %v902 = vunpack.c.h.b16 %v307
    %v903 = vunpack.c.l.b16 %v308
    %v904 = vunpack.c.h.b16 %v308
    %v905 = vunpack.c.l.b16 %v309
    %v906 = vunpack.c.h.b16 %v309
    %v907 = vunpack.c.l.b16 %v310
    %v908 = vunpack.c.l.b16 %v311
    %v909 = vunpack.c.h.b16 %v311
    %v910 = vunpack.c.l.b16 %v312
    %v911 = vunpack.c.h.b16 %v312
    %v912 = vunpack.c.l.b16 %v313
    %v913 = vunpack.c.h.b16 %v313
    %v914 = vunpack.c.l.b16 %v314
    %v915 = vunpack.c.l.b16 %v315
    %v916 = vunpack.c.h.b16 %v315
    %v917 = vunpack.c.l.b16 %v316
    %v918 = vunpack.c.h.b16 %v316
    %v919 = vunpack.c.l.b16 %v317
    %v920 = vunpack.c.h.b16 %v317
    %v921 = vunpack.c.l.b16 %v318
    %v922 = vunpack.c.l.b16 %v319
    %v923 = vunpack.c.h.b16 %v319
    %v924 = vunpack.c.l.b16 %v320
    %v925 = vunpack.c.h.b16 %v320
    %v926 = vunpack.c.l.b16 %v321
    %v927 = vunpack.c.h.b16 %v321
    %v928 = vunpack.c.l.b16 %v322
    %v929 = vunpack.c.l.b16 %v323
    %v930 = vunpack.c.h.b16 %v323
    %v931 = vunpack.c.l.b16 %v324
    %v932 = vunpack.c.h.b16 %v324
    %v933 = vunpack.c.l.b16 %v325
    %v934 = vunpack.c.h.b16 %v325
    %v935 = vunpack.c.l.b16 %v326
    %v936 = vunpack.c.l.b16 %v327
    %v937 = vunpack.c.h.b16 %v327
    %v938 = vunpack.c.l.b16 %v328
    %v939 = vunpack.c.h.b16 %v328
    %v940 = vunpack.c.l.b16 %v329
    %v941 = vunpack.c.h.b16 %v329
    %v942 = vunpack.c.l.b16 %v330
    %v943 = vunpack.c.l.b16 %v331
    %v944 = vunpack.c.h.b16 %v331
    %v945 = vunpack.c.l.b16 %v332
    %v946 = vunpack.c.h.b16 %v332
    %v947 = vunpack.c.l.b16 %v333
    %v948 = vunpack.c.h.b16 %v333
    %v949 = vunpack.c.l.b16 %v334
    %v950 = vunpack.c.l.b16 %v335
    %v951 = vunpack.c.h.b16 %v335
    %v952 = vunpack.c.l.b16 %v336
    %v953 = vunpack.c.h.b16 %v336
    %v954 = vunpack.c.l.b16 %v337
    %v955 = vunpack.c.h.b16 %v337
    %v956 = vunpack.c.l.b16 %v338
    %v957 = vunpack.c.l.b16 %v339
    %v958 = vunpack.c.h.b16 %v339
    %v959 = vunpack.c.l.b16 %v340
    %v960 = vunpack.c.h.b16 %v340
    %v961 = vunpack.c.l.b16 %v341
    %v962 = vunpack.c.h.b16 %v341
    %v963 = vunpack.c.l.b16 %v342
    %v964 = vunpack.c.l.b16 %v343
    %v965 = vunpack.c.h.b16 %v343
    %v966 = vunpack.c.l.b16 %v344
    %v967 = vunpack.c.h.b16 %v344
    %v968 = vunpack.c.l.b16 %v345
    %v969 = vunpack.c.h.b16 %v345
    %v970 = vunpack.c.l.b16 %v346
    %v971 = vunpack.c.l.b16 %v347
    %v972 = vunpack.c.h.b16 %v347
    %v973 = vunpack.c.l.b16 %v348
    %v974 = vunpack.c.h.b16 %v348
    %v975 = vunpack.c.l.b16 %v349
    %v976 = vunpack.c.h.b16 %v349
    %v977 = vunpack.c.l.b16 %v350
    %v978 = vunpack.c.l.b16 %v351
    %v979 = vunpack.c.h.b16 %v351
    %v980 = vunpack.c.l.b16 %v352
    %v981 = vunpack.c.h.b16 %v352
    %v982 = vunpack.c.l.b16 %v353
    %v983 = vunpack.c.h.b16 %v353
    %v984 = vunpack.c.l.b16 %v354
    %v985 = vunpack.c.l.b16 %v355
    %v986 = vunpack.c.h.b16 %v355
    %v987 = vunpack.c.l.b16 %v356
    %v988 = vunpack.c.h.b16 %v356
    %v989 = vunpack.c.l.b16 %v357
    %v990 = vunpack.c.h.b16 %v357
    %v991 = vunpack.c.l.b16 %v358
    %v992 = vunpack.c.l.b16 %v359
    %v993 = vunpack.c.h.b16 %v359
    %v994 = vunpack.c.l.b16 %v360
    %v995 = vunpack.c.h.b16 %v360
    %v996 = vunpack.c.l.b16 %v361
    %v997 = vunpack.c.h.b16 %v361
    %v998 = vunpack.c.l.b16 %v362
    %v999 = vunpack.c.l.b16 %v363
    %v1000 = vunpack.c.h.b16 %v363
    %v1001 = vunpack.c.l.b16 %v364
    %v1002 = vunpack.c.h.b16 %v364
    %v1003 = vunpack.c.l.b16 %v365
    %v1004 = vunpack.c.h.b16 %v365
    %v1005 = vunpack.c.l.b16 %v366
    %v1006 = vunpack.c.l.b16 %v367
    %v1007 = vunpack.c.h.b16 %v367
    %v1008 = vunpack.c.l.b16 %v368
    %v1009 = vunpack.c.h.b16 %v368
    %v1010 = vunpack.c.l.b16 %v369
    %v1011 = vunpack.c.h.b16 %v369
    %v1012 = vunpack.c.l.b16 %v370
    %v1013 = vunpack.c.l.b16 %v371
    %v1014 = vunpack.c.h.b16 %v371
    %v1015 = vunpack.c.l.b16 %v372
    %v1016 = vunpack.c.h.b16 %v372
    %v1017 = vunpack.c.l.b16 %v373
    %v1018 = vunpack.c.h.b16 %v373
    %v1019 = vunpack.c.l.b16 %v374
    %v1020 = vunpack.c.l.b16 %v375
    %v1021 = vunpack.c.h.b16 %v375
    %v1022 = vunpack.c.l.b16 %v376
    %v1023 = vunpack.c.h.b16 %v376
    %v1024 = vunpack.c.l.b16 %v377
    %v1025 = vunpack.c.h.b16 %v377
    %v1026 = vunpack.c.l.b16 %v378
    %v1027 = vunpack.c.l.b16 %v379
    %v1028 = vunpack.c.h.b16 %v379
    %v1029 = vunpack.c.l.b16 %v380
    %v1030 = vunpack.c.h.b16 %v380
    %v1031 = vunpack.c.l.b16 %v381
    %v1032 = vunpack.c.h.b16 %v381
    %v1033 = vunpack.c.l.b16 %v382
    %v1034 = vunpack.c.l.b16 %v383
    %v1035 = vunpack.c.h.b16 %v383
    %v1036 = vunpack.c.l.b16 %v384
    %v1037 = vunpack.c.h.b16 %v384
    %v1038 = vunpack.c.l.b16 %v385
    %v1039 = vunpack.c.h.b16 %v385
    %v1040 = vunpack.c.l.b16 %v386
    %v1041 = vunpack.c.l.b16 %v387
    %v1042 = vunpack.c.h.b16 %v387
    %v1043 = vunpack.c.l.b16 %v388
    %v1044 = vunpack.c.h.b16 %v388
    %v1045 = vunpack.c.l.b16 %v389
    %v1046 = vunpack.c.h.b16 %v389
    %v1047 = vunpack.c.l.b16 %v390
    %v1048 = vunpack.c.l.b16 %v391
    %v1049 = vunpack.c.h.b16 %v391
    %v1050 = vunpack.c.l.b16 %v392
    %v1051 = vunpack.c.h.b16 %v392
    %v1052 = vunpack.c.l.b16 %v393
    %v1053 = vunpack.c.h.b16 %v393
    %v1054 = vunpack.c.l.b16 %v394
    %v1055 = vunpack.c.l.b16 %v395
    %v1056 = vunpack.c.h.b16 %v395
    %v1057 = vunpack.c.l.b16 %v396
    %v1058 = vunpack.c.h.b16 %v396
    %v1059 = vunpack.c.l.b16 %v397
    %v1060 = vunpack.c.h.b16 %v397
    %v1061 = vunpack.c.l.b16 %v398
    %v1062 = vunpack.c.l.b16 %v399
    %v1063 = vunpack.c.h.b16 %v399
    %v1064 = vunpack.c.l.b16 %v400
    %v1065 = vunpack.c.h.b16 %v400
    %v1066 = vunpack.c.l.b16 %v401
    %v1067 = vunpack.c.h.b16 %v401
    %v1068 = vunpack.c.l.b16 %v402
    %v1069 = vunpack.c.l.b16 %v403
    %v1070 = vunpack.c.h.b16 %v403
    %v1071 = vunpack.c.l.b16 %v404
    %v1072 = vunpack.c.h.b16 %v404
    %v1073 = vunpack.c.l.b16 %v405
    %v1074 = vunpack.c.h.b16 %v405
    %v1075 = vunpack.c.l.b16 %v406
    %v1076 = vunpack.c.l.b16 %v407
    %v1077 = vunpack.c.h.b16 %v407
    %v1078 = vunpack.c.l.b16 %v408
    %v1079 = vunpack.c.h.b16 %v408
    %v1080 = vunpack.c.l.b16 %v409
    %v1081 = vunpack.c.h.b16 %v409
    %v1082 = vunpack.c.l.b16 %v410
    %v1083 = vunpack.c.l.b16 %v411
    %v1084 = vunpack.c.h.b16 %v411
    %v1085 = vunpack.c.l.b16 %v412
    %v1086 = vunpack.c.h.b16 %v412
    %v1087 = vunpack.c.l.b16 %v413
    %v1088 = vunpack.c.h.b16 %v413
    %v1089 = vunpack.c.l.b16 %v414
    %v1090 = vunpack.c.l.b16 %v415
    %v1091 = vunpack.c.h.b16 %v415
    %v1092 = vunpack.c.l.b16 %v416
    %v1093 = vunpack.c.h.b16 %v416
    %v1094 = vunpack.c.l.b16 %v417
    %v1095 = vunpack.c.h.b16 %v417
    %v1096 = vunpack.c.l.b16 %v418
    %v1097 = vunpack.c.l.b16 %v419
    %v1098 = vunpack.c.h.b16 %v419
    %v1099 = vunpack.c.l.b16 %v420
    %v1100 = vunpack.c.h.b16 %v420
    %v1101 = vunpack.c.l.b16 %v421
    %v1102 = vunpack.c.h.b16 %v421
    %v1103 = vunpack.c.l.b16 %v422
    %v1104 = vunpack.c.l.b16 %v423
    %v1105 = vunpack.c.h.b16 %v423
    %v1106 = vunpack.c.l.b16 %v424
    %v1107 = vunpack.c.h.b16 %v424
    %v1108 = vunpack.c.l.b16 %v425
    %v1109 = vunpack.c.h.b16 %v425
    %v1110 = vunpack.c.l.b16 %v426
    %v1111 = vunpack.c.l.b16 %v427
    %v1112 = vunpack.c.h.b16 %v427
    %v1113 = vunpack.c.l.b16 %v428
    %v1114 = vunpack.c.h.b16 %v428
    %v1115 = vunpack.c.l.b16 %v429
    %v1116 = vunpack.c.h.b16 %v429
    %v1117 = vunpack.c.l.b16 %v430
    %v1118 = vunpack.c.l.b16 %v431
    %v1119 = vunpack.c.h.b16 %v431
    %v1120 = vunpack.c.l.b16 %v432
    %v1121 = vunpack.c.h.b16 %v432
    %v1122 = vunpack.c.l.b16 %v433
    %v1123 = vunpack.c.h.b16 %v433
    %v1124 = vunpack.c.l.b16 %v434
    %v1125 = vunpack.c.l.b16 %v435
    %v1126 = vunpack.c.h.b16 %v435
    %v1127 = vunpack.c.l.b16 %v436
    %v1128 = vunpack.c.h.b16 %v436
    %v1129 = vunpack.c.l.b16 %v437
    %v1130 = vunpack.c.h.b16 %v437
    %v1131 = vunpack.c.l.b16 %v438
    %v1132 = vunpack.c.l.b16 %v439
    %v1133 = vunpack.c.h.b16 %v439
    %v1134 = vunpack.c.l.b16 %v440
    %v1135 = vunpack.c.h.b16 %v440
    %v1136 = vunpack.c.l.b16 %v441
    %v1137 = vunpack.c.h.b16 %v441
    %v1138 = vunpack.c.l.b16 %v442
    %v1139 = vunpack.c.l.b16 %v443
    %v1140 = vunpack.c.h.b16 %v443
    %v1141 = vunpack.c.l.b16 %v444
    %v1142 = vunpack.c.h.b16 %v444
    %v1143 = vunpack.c.l.b16 %v445
    %v1144 = vunpack.c.h.b16 %v445
    %v1145 = vunpack.c.l.b16 %v446
    %v1146 = vunpack.c.l.b16 %v447
    %v1147 = vunpack.c.h.b16 %v447
    %v1148 = vunpack.c.l.b16 %v448
    %v1149 = vunpack.c.h.b16 %v448
    %v1150 = vunpack.c.l.b16 %v449
    %v1151 = vunpack.c.h.b16 %v449
    %v1152 = vunpack.c.l.b16 %v450
    %v1153 = vunpack.c.l.b16 %v451
    %v1154 = vunpack.c.h.b16 %v451
    %v1155 = vunpack.c.l.b16 %v452
    %v1156 = vunpack.c.h.b16 %v452
    %v1157 = vunpack.c.l.b16 %v453
    %v1158 = vunpack.c.h.b16 %v453
    %v1159 = vunpack.c.l.b16 %v454
    %v1160 = vunpack.c.l.b16 %v455
    %v1161 = vunpack.c.h.b16 %v455
    %v1162 = vunpack.c.l.b16 %v456
    %v1163 = vunpack.c.h.b16 %v456
    %v1164 = vunpack.c.l.b16 %v457
    %v1165 = vunpack.c.h.b16 %v457
    %v1166 = vunpack.c.l.b16 %v458
    %v1167 = vunpack.c.l.b16 %v459
    %v1168 = vunpack.c.h.b16 %v459
    %v1169 = vunpack.c.l.b16 %v460
    %v1170 = vunpack.c.h.b16 %v460
    %v1171 = vunpack.c.l.b16 %v461
    %v1172 = vunpack.c.h.b16 %v461
    %v1173 = vunpack.c.l.b16 %v462
    %v1174 = vunpack.c.l.b16 %v463
    %v1175 = vunpack.c.h.b16 %v463
    %v1176 = vunpack.c.l.b16 %v464
    %v1177 = vunpack.c.h.b16 %v464
    %v1178 = vunpack.c.l.b16 %v465
    %v1179 = vunpack.c.h.b16 %v465
    %v1180 = vunpack.c.l.b16 %v466
    %v1181 = vunpack.c.l.b16 %v467
    %v1182 = vunpack.c.h.b16 %v467
    %v1183 = vunpack.c.l.b16 %v468
    %v1184 = vunpack.c.h.b16 %v468
    %v1185 = vunpack.c.l.b16 %v469
    %v1186 = vunpack.c.h.b16 %v469
    %v1187 = vunpack.c.l.b16 %v470
    %v1188 = vunpack.c.l.b16 %v471
    %v1189 = vunpack.c.h.b16 %v471
    %v1190 = vunpack.c.l.b16 %v472
    %v1191 = vunpack.c.h.b16 %v472
    %v1192 = vunpack.c.l.b16 %v473
    %v1193 = vunpack.c.h.b16 %v473
    %v1194 = vunpack.c.l.b16 %v474
    %v1195 = vpack.c.b16 %v754, %v747
    %v1196 = vpack.c.b16 %v755, %v748
    %v1197 = vpack.c.b16 %v756, %v749
    %v1198 = vpack.c.b16 %v757, %v750
    %v1199 = vpack.c.b16 %v758, %v751
    %v1200 = vpack.c.b16 %v759, %v752
    %v1201 = vpack.c.b16 %v760, %v753
    %v1202 = vpack.c.b16 %v768, %v761
    %v1203 = vpack.c.b16 %v769, %v762
    %v1204 = vpack.c.b16 %v770, %v763
    %v1205 = vpack.c.b16 %v771, %v764
    %v1206 = vpack.c.b16 %v772, %v765
    %v1207 = vpack.c.b16 %v773, %v766
    %v1208 = vpack.c.b16 %v774, %v767
    %v1209 = vpack.c.b16 %v782, %v775
    %v1210 = vpack.c.b16 %v783, %v776
    %v1211 = vpack.c.b16 %v784, %v777
    %v1212 = vpack.c.b16 %v785, %v778
    %v1213 = vpack.c.b16 %v786, %v779
    %v1214 = vpack.c.b16 %v787, %v780
    %v1215 = vpack.c.b16 %v788, %v781
    %v1216 = vpack.c.b16 %v796, %v789
    %v1217 = vpack.c.b16 %v797, %v790
    %v1218 = vpack.c.b16 %v798, %v791
    %v1219 = vpack.c.b16 %v799, %v792
    %v1220 = vpack.c.b16 %v800, %v793
    %v1221 = vpack.c.b16 %v801, %v794
    %v1222 = vpack.c.b16 %v802, %v795
    %v1223 = vpack.c.b16 %v810, %v803
    %v1224 = vpack.c.b16 %v811, %v804
    %v1225 = vpack.c.b16 %v812, %v805
    %v1226 = vpack.c.b16 %v813, %v806
    %v1227 = vpack.c.b16 %v814, %v807
    %v1228 = vpack.c.b16 %v815, %v808
    %v1229 = vpack.c.b16 %v816, %v809
    %v1230 = vpack.c.b16 %v824, %v817
    %v1231 = vpack.c.b16 %v825, %v818
    %v1232 = vpack.c.b16 %v826, %v819
    %v1233 = vpack.c.b16 %v827, %v820
    %v1234 = vpack.c.b16 %v828, %v821
    %v1235 = vpack.c.b16 %v829, %v822
    %v1236 = vpack.c.b16 %v830, %v823
    %v1237 = vpack.c.b16 %v838, %v831
    %v1238 = vpack.c.b16 %v839, %v832
    %v1239 = vpack.c.b16 %v840, %v833
    %v1240 = vpack.c.b16 %v841, %v834
    %v1241 = vpack.c.b16 %v842, %v835
    %v1242 = vpack.c.b16 %v843, %v836
    %v1243 = vpack.c.b16 %v844, %v837
    %v1244 = vpack.c.b16 %v852, %v845
    %v1245 = vpack.c.b16 %v853, %v846
    %v1246 = vpack.c.b16 %v854, %v847
    %v1247 = vpack.c.b16 %v855, %v848
    %v1248 = vpack.c.b16 %v856, %v849
    %v1249 = vpack.c.b16 %v857, %v850
    %v1250 = vpack.c.b16 %v858, %v851
    %v1251 = vpack.c.b16 %v866, %v859
    %v1252 = vpack.c.b16 %v867, %v860
    %v1253 = vpack.c.b16 %v868, %v861
    %v1254 = vpack.c.b16 %v869, %v862
    %v1255 = vpack.c.b16 %v870, %v863
    %v1256 = vpack.c.b16 %v871, %v864
    %v1257 = vpack.c.b16 %v872, %v865
    %v1258 = vpack.c.b16 %v880, %v873
    %v1259 = vpack.c.b16 %v881, %v874
    %v1260 = vpack.c.b16 %v882, %v875
    %v1261 = vpack.c.b16 %v883, %v876
    %v1262 = vpack.c.b16 %v884, %v877
    %v1263 = vpack.c.b16 %v885, %v878
    %v1264 = vpack.c.b16 %v886, %v879
    %v1265 = vpack.c.b16 %v894, %v887
    %v1266 = vpack.c.b16 %v895, %v888
    %v1267 = vpack.c.b16 %v896, %v889
    %v1268 = vpack.c.b16 %v897, %v890
    %v1269 = vpack.c.b16 %v898, %v891
    %v1270 = vpack.c.b16 %v899, %v892
    %v1271 = vpack.c.b16 %v900, %v893
    %v1272 = vpack.c.b16 %v908, %v901
    %v1273 = vpack.c.b16 %v909, %v902
    %v1274 = vpack.c.b16 %v910, %v903
    %v1275 = vpack.c.b16 %v911, %v904
    %v1276 = vpack.c.b16 %v912, %v905
    %v1277 = vpack.c.b16 %v913, %v906
    %v1278 = vpack.c.b16 %v914, %v907
    %v1279 = vpack.c.b16 %v922, %v915
    %v1280 = vpack.c.b16 %v923, %v916
    %v1281 = vpack.c.b16 %v924, %v917
    %v1282 = vpack.c.b16 %v925, %v918
    %v1283 = vpack.c.b16 %v926, %v919
    %v1284 = vpack.c.b16 %v927, %v920
    %v1285 = vpack.c.b16 %v928, %v921
    %v1286 = vpack.c.b16 %v936, %v929
    %v1287 = vpack.c.b16 %v937, %v930
    %v1288 = vpack.c.b16 %v938, %v931
    %v1289 = vpack.c.b16 %v939, %v932
    %v1290 = vpack.c.b16 %v940, %v933
    %v1291 = vpack.c.b16 %v941, %v934
    %v1292 = vpack.c.b16 %v942, %v935
    %v1293 = vpack.c.b16 %v950, %v943
    %v1294 = vpack.c.b16 %v951, %v944
    %v1295 = vpack.c.b16 %v952, %v945
    %v1296 = vpack.c.b16 %v953, %v946
    %v1297 = vpack.c.b16 %v954, %v947
    %v1298 = vpack.c.b16 %v955, %v948
    %v1299 = vpack.c.b16 %v956, %v949
    %v1300 = vpack.c.b16 %v964, %v957
    %v1301 = vpack.c.b16 %v965, %v958
    %v1302 = vpack.c.b16 %v966, %v959
    %v1303 = vpack.c.b16 %v967, %v960
    %v1304 = vpack.c.b16 %v968, %v961
    %v1305 = vpack.c.b16 %v969, %v962
    %v1306 = vpack.c.b16 %v970, %v963
    %v1307 = vpack.c.b16 %v978, %v971
    %v1308 = vpack.c.b16 %v979, %v972
    %v1309 = vpack.c.b16 %v980, %v973
    %v1310 = vpack.c.b16 %v981, %v974
    %v1311 = vpack.c.b16 %v982, %v975
    %v1312 = vpack.c.b16 %v983, %v976
    %v1313 = vpack.c.b16 %v984, %v977
    %v1314 = vpack.c.b16 %v992, %v985
    %v1315 = vpack.c.b16 %v993, %v986
    %v1316 = vpack.c.b16 %v994, %v987
    %v1317 = vpack.c.b16 %v995, %v988
    %v1318 = vpack.c.b16 %v996, %v989
    %v1319 = vpack.c.b16 %v997, %v990
    %v1320 = vpack.c.b16 %v998, %v991
    %v1321 = vpack.c.b16 %v1006, %v999
    %v1322 = vpack.c.b16 %v1007, %v1000
    %v1323 = vpack.c.b16 %v1008, %v1001
    %v1324 = vpack.c.b16 %v1009, %v1002
    %v1325 = vpack.c.b16 %v1010, %v1003
    %v1326 = vpack.c.b16 %v1011, %v1004
    %v1327 = vpack.c.b16 %v1012, %v1005
    %v1328 = vpack.c.b16 %v1020, %v1013
    %v1329 = vpack.c.b16 %v1021, %v1014
    %v1330 = vpack.c.b16 %v1022, %v1015
    %v1331 = vpack.c.b16 %v1023, %v1016
    %v1332 = vpack.c.b16 %v1024, %v1017
    %v1333 = vpack.c.b16 %v1025, %v1018
    %v1334 = vpack.c.b16 %v1026, %v1019
    %v1335 = vpack.c.b16 %v1034, %v1027
    %v1336 = vpack.c.b16 %v1035, %v1028
    %v1337 = vpack.c.b16 %v1036, %v1029
    %v1338 = vpack.c.b16 %v1037, %v1030
    %v1339 = vpack.c.b16 %v1038, %v1031
    %v1340 = vpack.c.b16 %v1039, %v1032
    %v1341 = vpack.c.b16 %v1040, %v1033
    %v1342 = vpack.c.b16 %v1048, %v1041
    %v1343 = vpack.c.b16 %v1049, %v1042
    %v1344 = vpack.c.b16 %v1050, %v1043
    %v1345 = vpack.c.b16 %v1051, %v1044
    %v1346 = vpack.c.b16 %v1052, %v1045
    %v1347 = vpack.c.b16 %v1053, %v1046
    %v1348 = vpack.c.b16 %v1054, %v1047
    %v1349 = vpack.c.b16 %v1062, %v1055
    %v1350 = vpack.c.b16 %v1063, %v1056
    %v1351 = vpack.c.b16 %v1064, %v1057
    %v1352 = vpack.c.b16 %v1065, %v1058
    %v1353 = vpack.c.b16 %v1066, %v1059
    %v1354 = vpack.c.b16 %v1067, %v1060
    %v1355 = vpack.c.b16 %v1068, %v1061
    %v1356 = vpack.c.b16 %v1076, %v1069
    %v1357 = vpack.c.b16 %v1077, %v1070
    %v1358 = vpack.c.b16 %v1078, %v1071
    %v1359 = vpack.c.b16 %v1079, %v1072
    %v1360 = vpack.c.b16 %v1080, %v1073
    %v1361 = vpack.c.b16 %v1081, %v1074
    %v1362 = vpack.c.b16 %v1082, %v1075
    %v1363 = vpack.c.b16 %v1090, %v1083
    %v1364 = vpack.c.b16 %v1091, %v1084
    %v1365 = vpack.c.b16 %v1092, %v1085
    %v1366 = vpack.c.b16 %v1093, %v1086
    %v1367 = vpack.c.b16 %v1094, %v1087
    %v1368 = vpack.c.b16 %v1095, %v1088
    %v1369 = vpack.c.b16 %v1096, %v1089
    %v1370 = vpack.c.b16 %v1104, %v1097
    %v1371 = vpack.c.b16 %v1105, %v1098
    %v1372 = vpack.c.b16 %v1106, %v1099
    %v1373 = vpack.c.b16 %v1107, %v1100
    %v1374 = vpack.c.b16 %v1108, %v1101
    %v1375 = vpack.c.b16 %v1109, %v1102
    %v1376 = vpack.c.b16 %v1110, %v1103
    %v1377 = vpack.c.b16 %v1118, %v1111
    %v1378 = vpack.c.b16 %v1119, %v1112
    %v1379 = vpack.c.b16 %v1120, %v1113
    %v1380 = vpack.c.b16 %v1121, %v1114
    %v1381 = vpack.c.b16 %v1122, %v1115
    %v1382 = vpack.c.b16 %v1123, %v1116
    %v1383 = vpack.c.b16 %v1124, %v1117
    %v1384 = vpack.c.b16 %v1132, %v1125
    %v1385 = vpack.c.b16 %v1133, %v1126
    %v1386 = vpack.c.b16 %v1134, %v1127
    %v1387 = vpack.c.b16 %v1135, %v1128
    %v1388 = vpack.c.b16 %v1136, %v1129
    %v1389 = vpack.c.b16 %v1137, %v1130
    %v1390 = vpack.c.b16 %v1138, %v1131
    %v1391 = vpack.c.b16 %v1146, %v1139
    %v1392 = vpack.c.b16 %v1147, %v1140
    %v1393 = vpack.c.b16 %v1148, %v1141
    %v1394 = vpack.c.b16 %v1149, %v1142
    %v1395 = vpack.c.b16 %v1150, %v1143
    %v1396 = vpack.c.b16 %v1151, %v1144
    %v1397 = vpack.c.b16 %v1152, %v1145
    %v1398 = vpack.c.b16 %v1160, %v1153
    %v1399 = vpack.c.b16 %v1161, %v1154
    %v1400 = vpack.c.b16 %v1162, %v1155
    %v1401 = vpack.c.b16 %v1163, %v1156
    %v1402 = vpack.c.b16 %v1164, %v1157
    %v1403 = vpack.c.b16 %v1165, %v1158
    %v1404 = vpack.c.b16 %v1166, %v1159
    %v1405 = vpack.c.b16 %v1174, %v1167
    %v1406 = vpack.c.b16 %v1175, %v1168
    %v1407 = vpack.c.b16 %v1176, %v1169
    %v1408 = vpack.c.b16 %v1177, %v1170
    %v1409 = vpack.c.b16 %v1178, %v1171
    %v1410 = vpack.c.b16 %v1179, %v1172
    %v1411 = vpack.c.b16 %v1180, %v1173
    %v1412 = vpack.c.b16 %v1188, %v1181
    %v1413 = vpack.c.b16 %v1189, %v1182
    %v1414 = vpack.c.b16 %v1190, %v1183
    %v1415 = vpack.c.b16 %v1191, %v1184
    %v1416 = vpack.c.b16 %v1192, %v1185
    %v1417 = vpack.c.b16 %v1193, %v1186
    %v1418 = vpack.c.b16 %v1194, %v1187
    %1643 = vmatpush.bf16.msra.mxu0 %v1244
    %1644 = vmatpush.bf16.msra.mxu0 %v1237
    %1645 = vmatpush.bf16.msra.mxu0 %v1230
    %1646 = vmatpush.bf16.msra.mxu0 %v1223
    %1647 = vmatpush.bf16.msra.mxu0 %v1216
    %1648 = vmatpush.bf16.msra.mxu0 %v1209
    %1649 = vmatpush.bf16.msra.mxu0 %v1202
    %1650 = vmatpush.bf16.msra.mxu0 %v1195
    %1651 = vmatmul.bf16.gmra.mxu0 %v215
    %v1652 = vpop.f32.mrf.mxu0
    %v1653 = vadd.f32 %v477, %v1652
    %v1654 = vpop.f32.mrf.mxu0
    %1655 = vdwg.mxu0
    %1656 = vmatpush.bf16.msra.mxu0 %v1300
    %1657 = vmatpush.bf16.msra.mxu0 %v1293
    %1658 = vmatpush.bf16.msra.mxu0 %v1286
    %1659 = vmatpush.bf16.msra.mxu0 %v1279
    %1660 = vmatpush.bf16.msra.mxu0 %v1272
    %1661 = vmatpush.bf16.msra.mxu0 %v1265
    %1662 = vmatpush.bf16.msra.mxu0 %v1258
    %1663 = vmatpush.bf16.msra.mxu0 %v1251
    %1664 = vmatmul.bf16.gmra.mxu0 %v216
    %v1665 = vpop.f32.mrf.mxu0
    %v1666 = vadd.f32 %v1653, %v1665
    %v1667 = vpop.f32.mrf.mxu0
    %1668 = vdwg.mxu0
    %1669 = vmatpush.bf16.msra.mxu0 %v1356
    %1670 = vmatpush.bf16.msra.mxu0 %v1349
    %1671 = vmatpush.bf16.msra.mxu0 %v1342
    %1672 = vmatpush.bf16.msra.mxu0 %v1335
    %1673 = vmatpush.bf16.msra.mxu0 %v1328
    %1674 = vmatpush.bf16.msra.mxu0 %v1321
    %1675 = vmatpush.bf16.msra.mxu0 %v1314
    %1676 = vmatpush.bf16.msra.mxu0 %v1307
    %1677 = vmatmul.bf16.gmra.mxu0 %v217
    %v1678 = vpop.f32.mrf.mxu0
    %v1679 = vadd.f32 %v1666, %v1678
    %v1680 = vpop.f32.mrf.mxu0
    %1681 = vdwg.mxu0
    %1682 = vmatpush.bf16.msra.mxu0 %v1412
    %1683 = vmatpush.bf16.msra.mxu0 %v1405
    %1684 = vmatpush.bf16.msra.mxu0 %v1398
    %1685 = vmatpush.bf16.msra.mxu0 %v1391
    %1686 = vmatpush.bf16.msra.mxu0 %v1384
    %1687 = vmatpush.bf16.msra.mxu0 %v1377
    %1688 = vmatpush.bf16.msra.mxu0 %v1370
    %1689 = vmatpush.bf16.msra.mxu0 %v1363
    %1690 = vmatmul.bf16.gmra.mxu0 %v218
    %v1691 = vpop.f32.mrf.mxu0
    %v1692 = vadd.f32 %v1679, %v1691
    %v1693 = vpop.f32.mrf.mxu0
    %1694 = vdwg.mxu0
    %1695 = vmatpush.bf16.msra.mxu0 %v1245
    %1696 = vmatpush.bf16.msra.mxu0 %v1238
    %1697 = vmatpush.bf16.msra.mxu0 %v1231
    %1698 = vmatpush.bf16.msra.mxu0 %v1224
    %1699 = vmatpush.bf16.msra.mxu0 %v1217
    %1700 = vmatpush.bf16.msra.mxu0 %v1210
    %1701 = vmatpush.bf16.msra.mxu0 %v1203
    %1702 = vmatpush.bf16.msra.mxu0 %v1196
    %1703 = vmatmul.bf16.gmra.mxu0 %v215
    %v1704 = vpop.f32.mrf.mxu0
    %v1705 = vadd.f32 %v478, %v1704
    %v1706 = vpop.f32.mrf.mxu0
    %1707 = vdwg.mxu0
    %1708 = vmatpush.bf16.msra.mxu0 %v1301
    %1709 = vmatpush.bf16.msra.mxu0 %v1294
    %1710 = vmatpush.bf16.msra.mxu0 %v1287
    %1711 = vmatpush.bf16.msra.mxu0 %v1280
    %1712 = vmatpush.bf16.msra.mxu0 %v1273
    %1713 = vmatpush.bf16.msra.mxu0 %v1266
    %1714 = vmatpush.bf16.msra.mxu0 %v1259
    %1715 = vmatpush.bf16.msra.mxu0 %v1252
    %1716 = vmatmul.bf16.gmra.mxu0 %v216
    %v1717 = vpop.f32.mrf.mxu0
    %v1718 = vadd.f32 %v1705, %v1717
    %v1719 = vpop.f32.mrf.mxu0
    %1720 = vdwg.mxu0
    %1721 = vmatpush.bf16.msra.mxu0 %v1357
    %1722 = vmatpush.bf16.msra.mxu0 %v1350
    %1723 = vmatpush.bf16.msra.mxu0 %v1343
    %1724 = vmatpush.bf16.msra.mxu0 %v1336
    %1725 = vmatpush.bf16.msra.mxu0 %v1329
    %1726 = vmatpush.bf16.msra.mxu0 %v1322
    %1727 = vmatpush.bf16.msra.mxu0 %v1315
    %1728 = vmatpush.bf16.msra.mxu0 %v1308
    %1729 = vmatmul.bf16.gmra.mxu0 %v217
    %v1730 = vpop.f32.mrf.mxu0
    %v1731 = vadd.f32 %v1718, %v1730
    %v1732 = vpop.f32.mrf.mxu0
    %1733 = vdwg.mxu0
    %1734 = vmatpush.bf16.msra.mxu0 %v1413
    %1735 = vmatpush.bf16.msra.mxu0 %v1406
    %1736 = vmatpush.bf16.msra.mxu0 %v1399
    %1737 = vmatpush.bf16.msra.mxu0 %v1392
    %1738 = vmatpush.bf16.msra.mxu0 %v1385
    %1739 = vmatpush.bf16.msra.mxu0 %v1378
    %1740 = vmatpush.bf16.msra.mxu0 %v1371
    %1741 = vmatpush.bf16.msra.mxu0 %v1364
    %1742 = vmatmul.bf16.gmra.mxu0 %v218
    %v1743 = vpop.f32.mrf.mxu0
    %v1744 = vadd.f32 %v1731, %v1743
    %v1745 = vpop.f32.mrf.mxu0
    %1746 = vdwg.mxu0
    %1747 = vmatpush.bf16.msra.mxu0 %v1246
    %1748 = vmatpush.bf16.msra.mxu0 %v1239
    %1749 = vmatpush.bf16.msra.mxu0 %v1232
    %1750 = vmatpush.bf16.msra.mxu0 %v1225
    %1751 = vmatpush.bf16.msra.mxu0 %v1218
    %1752 = vmatpush.bf16.msra.mxu0 %v1211
    %1753 = vmatpush.bf16.msra.mxu0 %v1204
    %1754 = vmatpush.bf16.msra.mxu0 %v1197
    %1755 = vmatmul.bf16.gmra.mxu0 %v215
    %v1756 = vpop.f32.mrf.mxu0
    %v1757 = vadd.f32 %v479, %v1756
    %v1758 = vpop.f32.mrf.mxu0
    %1759 = vdwg.mxu0
    %1760 = vmatpush.bf16.msra.mxu0 %v1302
    %1761 = vmatpush.bf16.msra.mxu0 %v1295
    %1762 = vmatpush.bf16.msra.mxu0 %v1288
    %1763 = vmatpush.bf16.msra.mxu0 %v1281
    %1764 = vmatpush.bf16.msra.mxu0 %v1274
    %1765 = vmatpush.bf16.msra.mxu0 %v1267
    %1766 = vmatpush.bf16.msra.mxu0 %v1260
    %1767 = vmatpush.bf16.msra.mxu0 %v1253
    %1768 = vmatmul.bf16.gmra.mxu0 %v216
    %v1769 = vpop.f32.mrf.mxu0
    %v1770 = vadd.f32 %v1757, %v1769
    %v1771 = vpop.f32.mrf.mxu0
    %1772 = vdwg.mxu0
    %1773 = vmatpush.bf16.msra.mxu0 %v1358
    %1774 = vmatpush.bf16.msra.mxu0 %v1351
    %1775 = vmatpush.bf16.msra.mxu0 %v1344
    %1776 = vmatpush.bf16.msra.mxu0 %v1337
    %1777 = vmatpush.bf16.msra.mxu0 %v1330
    %1778 = vmatpush.bf16.msra.mxu0 %v1323
    %1779 = vmatpush.bf16.msra.mxu0 %v1316
    %1780 = vmatpush.bf16.msra.mxu0 %v1309
    %1781 = vmatmul.bf16.gmra.mxu0 %v217
    %v1782 = vpop.f32.mrf.mxu0
    %v1783 = vadd.f32 %v1770, %v1782
    %v1784 = vpop.f32.mrf.mxu0
    %1785 = vdwg.mxu0
    %1786 = vmatpush.bf16.msra.mxu0 %v1414
    %1787 = vmatpush.bf16.msra.mxu0 %v1407
    %1788 = vmatpush.bf16.msra.mxu0 %v1400
    %1789 = vmatpush.bf16.msra.mxu0 %v1393
    %1790 = vmatpush.bf16.msra.mxu0 %v1386
    %1791 = vmatpush.bf16.msra.mxu0 %v1379
    %1792 = vmatpush.bf16.msra.mxu0 %v1372
    %1793 = vmatpush.bf16.msra.mxu0 %v1365
    %1794 = vmatmul.bf16.gmra.mxu0 %v218
    %v1795 = vpop.f32.mrf.mxu0
    %v1796 = vadd.f32 %v1783, %v1795
    %v1797 = vpop.f32.mrf.mxu0
    %1798 = vdwg.mxu0
    %1799 = vmatpush.bf16.msra.mxu0 %v1247
    %1800 = vmatpush.bf16.msra.mxu0 %v1240
    %1801 = vmatpush.bf16.msra.mxu0 %v1233
    %1802 = vmatpush.bf16.msra.mxu0 %v1226
    %1803 = vmatpush.bf16.msra.mxu0 %v1219
    %1804 = vmatpush.bf16.msra.mxu0 %v1212
    %1805 = vmatpush.bf16.msra.mxu0 %v1205
    %1806 = vmatpush.bf16.msra.mxu0 %v1198
    %1807 = vmatmul.bf16.gmra.mxu0 %v215
    %v1808 = vpop.f32.mrf.mxu0
    %v1809 = vadd.f32 %v480, %v1808
    %v1810 = vpop.f32.mrf.mxu0
    %1811 = vdwg.mxu0
    %1812 = vmatpush.bf16.msra.mxu0 %v1303
    %1813 = vmatpush.bf16.msra.mxu0 %v1296
    %1814 = vmatpush.bf16.msra.mxu0 %v1289
    %1815 = vmatpush.bf16.msra.mxu0 %v1282
    %1816 = vmatpush.bf16.msra.mxu0 %v1275
    %1817 = vmatpush.bf16.msra.mxu0 %v1268
    %1818 = vmatpush.bf16.msra.mxu0 %v1261
    %1819 = vmatpush.bf16.msra.mxu0 %v1254
    %1820 = vmatmul.bf16.gmra.mxu0 %v216
    %v1821 = vpop.f32.mrf.mxu0
    %v1822 = vadd.f32 %v1809, %v1821
    %v1823 = vpop.f32.mrf.mxu0
    %1824 = vdwg.mxu0
    %1825 = vmatpush.bf16.msra.mxu0 %v1359
    %1826 = vmatpush.bf16.msra.mxu0 %v1352
    %1827 = vmatpush.bf16.msra.mxu0 %v1345
    %1828 = vmatpush.bf16.msra.mxu0 %v1338
    %1829 = vmatpush.bf16.msra.mxu0 %v1331
    %1830 = vmatpush.bf16.msra.mxu0 %v1324
    %1831 = vmatpush.bf16.msra.mxu0 %v1317
    %1832 = vmatpush.bf16.msra.mxu0 %v1310
    %1833 = vmatmul.bf16.gmra.mxu0 %v217
    %v1834 = vpop.f32.mrf.mxu0
    %v1835 = vadd.f32 %v1822, %v1834
    %v1836 = vpop.f32.mrf.mxu0
    %1837 = vdwg.mxu0
    %1838 = vmatpush.bf16.msra.mxu0 %v1415
    %1839 = vmatpush.bf16.msra.mxu0 %v1408
    %1840 = vmatpush.bf16.msra.mxu0 %v1401
    %1841 = vmatpush.bf16.msra.mxu0 %v1394
    %1842 = vmatpush.bf16.msra.mxu0 %v1387
    %1843 = vmatpush.bf16.msra.mxu0 %v1380
    %1844 = vmatpush.bf16.msra.mxu0 %v1373
    %1845 = vmatpush.bf16.msra.mxu0 %v1366
    %1846 = vmatmul.bf16.gmra.mxu0 %v218
    %v1847 = vpop.f32.mrf.mxu0
    %v1848 = vadd.f32 %v1835, %v1847
    %v1849 = vpop.f32.mrf.mxu0
    %1850 = vdwg.mxu0
    %1851 = vmatpush.bf16.msra.mxu0 %v1248
    %1852 = vmatpush.bf16.msra.mxu0 %v1241
    %1853 = vmatpush.bf16.msra.mxu0 %v1234
    %1854 = vmatpush.bf16.msra.mxu0 %v1227
    %1855 = vmatpush.bf16.msra.mxu0 %v1220
    %1856 = vmatpush.bf16.msra.mxu0 %v1213
    %1857 = vmatpush.bf16.msra.mxu0 %v1206
    %1858 = vmatpush.bf16.msra.mxu0 %v1199
    %1859 = vmatmul.bf16.gmra.mxu0 %v215
    %v1860 = vpop.f32.mrf.mxu0
    %v1861 = vadd.f32 %v481, %v1860
    %v1862 = vpop.f32.mrf.mxu0
    %1863 = vdwg.mxu0
    %1864 = vmatpush.bf16.msra.mxu0 %v1304
    %1865 = vmatpush.bf16.msra.mxu0 %v1297
    %1866 = vmatpush.bf16.msra.mxu0 %v1290
    %1867 = vmatpush.bf16.msra.mxu0 %v1283
    %1868 = vmatpush.bf16.msra.mxu0 %v1276
    %1869 = vmatpush.bf16.msra.mxu0 %v1269
    %1870 = vmatpush.bf16.msra.mxu0 %v1262
    %1871 = vmatpush.bf16.msra.mxu0 %v1255
    %1872 = vmatmul.bf16.gmra.mxu0 %v216
    %v1873 = vpop.f32.mrf.mxu0
    %v1874 = vadd.f32 %v1861, %v1873
    %v1875 = vpop.f32.mrf.mxu0
    %1876 = vdwg.mxu0
    %1877 = vmatpush.bf16.msra.mxu0 %v1360
    %1878 = vmatpush.bf16.msra.mxu0 %v1353
    %1879 = vmatpush.bf16.msra.mxu0 %v1346
    %1880 = vmatpush.bf16.msra.mxu0 %v1339
    %1881 = vmatpush.bf16.msra.mxu0 %v1332
    %1882 = vmatpush.bf16.msra.mxu0 %v1325
    %1883 = vmatpush.bf16.msra.mxu0 %v1318
    %1884 = vmatpush.bf16.msra.mxu0 %v1311
    %1885 = vmatmul.bf16.gmra.mxu0 %v217
    %v1886 = vpop.f32.mrf.mxu0
    %v1887 = vadd.f32 %v1874, %v1886
    %v1888 = vpop.f32.mrf.mxu0
    %1889 = vdwg.mxu0
    %1890 = vmatpush.bf16.msra.mxu0 %v1416
    %1891 = vmatpush.bf16.msra.mxu0 %v1409
    %1892 = vmatpush.bf16.msra.mxu0 %v1402
    %1893 = vmatpush.bf16.msra.mxu0 %v1395
    %1894 = vmatpush.bf16.msra.mxu0 %v1388
    %1895 = vmatpush.bf16.msra.mxu0 %v1381
    %1896 = vmatpush.bf16.msra.mxu0 %v1374
    %1897 = vmatpush.bf16.msra.mxu0 %v1367
    %1898 = vmatmul.bf16.gmra.mxu0 %v218
    %v1899 = vpop.f32.mrf.mxu0
    %v1900 = vadd.f32 %v1887, %v1899
    %v1901 = vpop.f32.mrf.mxu0
    %1902 = vdwg.mxu0
    %1903 = vmatpush.bf16.msra.mxu0 %v1249
    %1904 = vmatpush.bf16.msra.mxu0 %v1242
    %1905 = vmatpush.bf16.msra.mxu0 %v1235
    %1906 = vmatpush.bf16.msra.mxu0 %v1228
    %1907 = vmatpush.bf16.msra.mxu0 %v1221
    %1908 = vmatpush.bf16.msra.mxu0 %v1214
    %1909 = vmatpush.bf16.msra.mxu0 %v1207
    %1910 = vmatpush.bf16.msra.mxu0 %v1200
    %1911 = vmatmul.bf16.gmra.mxu0 %v215
    %v1912 = vpop.f32.mrf.mxu0
    %v1913 = vadd.f32 %v482, %v1912
    %v1914 = vpop.f32.mrf.mxu0
    %1915 = vdwg.mxu0
    %1916 = vmatpush.bf16.msra.mxu0 %v1305
    %1917 = vmatpush.bf16.msra.mxu0 %v1298
    %1918 = vmatpush.bf16.msra.mxu0 %v1291
    %1919 = vmatpush.bf16.msra.mxu0 %v1284
    %1920 = vmatpush.bf16.msra.mxu0 %v1277
    %1921 = vmatpush.bf16.msra.mxu0 %v1270
    %1922 = vmatpush.bf16.msra.mxu0 %v1263
    %1923 = vmatpush.bf16.msra.mxu0 %v1256
    %1924 = vmatmul.bf16.gmra.mxu0 %v216
    %v1925 = vpop.f32.mrf.mxu0
    %v1926 = vadd.f32 %v1913, %v1925
    %v1927 = vpop.f32.mrf.mxu0
    %1928 = vdwg.mxu0
    %1929 = vmatpush.bf16.msra.mxu0 %v1361
    %1930 = vmatpush.bf16.msra.mxu0 %v1354
    %1931 = vmatpush.bf16.msra.mxu0 %v1347
    %1932 = vmatpush.bf16.msra.mxu0 %v1340
    %1933 = vmatpush.bf16.msra.mxu0 %v1333
    %1934 = vmatpush.bf16.msra.mxu0 %v1326
    %1935 = vmatpush.bf16.msra.mxu0 %v1319
    %1936 = vmatpush.bf16.msra.mxu0 %v1312
    %1937 = vmatmul.bf16.gmra.mxu0 %v217
    %v1938 = vpop.f32.mrf.mxu0
    %v1939 = vadd.f32 %v1926, %v1938
    %v1940 = vpop.f32.mrf.mxu0
    %1941 = vdwg.mxu0
    %1942 = vmatpush.bf16.msra.mxu0 %v1417
    %1943 = vmatpush.bf16.msra.mxu0 %v1410
    %1944 = vmatpush.bf16.msra.mxu0 %v1403
    %1945 = vmatpush.bf16.msra.mxu0 %v1396
    %1946 = vmatpush.bf16.msra.mxu0 %v1389
    %1947 = vmatpush.bf16.msra.mxu0 %v1382
    %1948 = vmatpush.bf16.msra.mxu0 %v1375
    %1949 = vmatpush.bf16.msra.mxu0 %v1368
    %1950 = vmatmul.bf16.gmra.mxu0 %v218
    %v1951 = vpop.f32.mrf.mxu0
    %v1952 = vadd.f32 %v1939, %v1951
    %v1953 = vpop.f32.mrf.mxu0
    %1954 = vdwg.mxu0
    %1955 = vmatpush.bf16.msra.mxu0 %v1250
    %1956 = vmatpush.bf16.msra.mxu0 %v1243
    %1957 = vmatpush.bf16.msra.mxu0 %v1236
    %1958 = vmatpush.bf16.msra.mxu0 %v1229
    %1959 = vmatpush.bf16.msra.mxu0 %v1222
    %1960 = vmatpush.bf16.msra.mxu0 %v1215
    %1961 = vmatpush.bf16.msra.mxu0 %v1208
    %1962 = vmatpush.bf16.msra.mxu0 %v1201
    %1963 = vmatmul.bf16.gmra.mxu0 %v215
    %v1964 = vpop.f32.mrf.mxu0
    %v1965 = vadd.f32 %v483, %v1964
    %v1966 = vpop.f32.mrf.mxu0
    %1967 = vdwg.mxu0
    %1968 = vmatpush.bf16.msra.mxu0 %v1306
    %1969 = vmatpush.bf16.msra.mxu0 %v1299
    %1970 = vmatpush.bf16.msra.mxu0 %v1292
    %1971 = vmatpush.bf16.msra.mxu0 %v1285
    %1972 = vmatpush.bf16.msra.mxu0 %v1278
    %1973 = vmatpush.bf16.msra.mxu0 %v1271
    %1974 = vmatpush.bf16.msra.mxu0 %v1264
    %1975 = vmatpush.bf16.msra.mxu0 %v1257
    %1976 = vmatmul.bf16.gmra.mxu0 %v216
    %v1977 = vpop.f32.mrf.mxu0
    %v1978 = vadd.f32 %v1965, %v1977
    %v1979 = vpop.f32.mrf.mxu0
    %1980 = vdwg.mxu0
    %1981 = vmatpush.bf16.msra.mxu0 %v1362
    %1982 = vmatpush.bf16.msra.mxu0 %v1355
    %1983 = vmatpush.bf16.msra.mxu0 %v1348
    %1984 = vmatpush.bf16.msra.mxu0 %v1341
    %1985 = vmatpush.bf16.msra.mxu0 %v1334
    %1986 = vmatpush.bf16.msra.mxu0 %v1327
    %1987 = vmatpush.bf16.msra.mxu0 %v1320
    %1988 = vmatpush.bf16.msra.mxu0 %v1313
    %1989 = vmatmul.bf16.gmra.mxu0 %v217
    %v1990 = vpop.f32.mrf.mxu0
    %v1991 = vadd.f32 %v1978, %v1990
    %v1992 = vpop.f32.mrf.mxu0
    %1993 = vdwg.mxu0
    %1994 = vmatpush.bf16.msra.mxu0 %v1418
    %1995 = vmatpush.bf16.msra.mxu0 %v1411
    %1996 = vmatpush.bf16.msra.mxu0 %v1404
    %1997 = vmatpush.bf16.msra.mxu0 %v1397
    %1998 = vmatpush.bf16.msra.mxu0 %v1390
    %1999 = vmatpush.bf16.msra.mxu0 %v1383
    %2000 = vmatpush.bf16.msra.mxu0 %v1376
    %2001 = vmatpush.bf16.msra.mxu0 %v1369
    %2002 = vmatmul.bf16.gmra.mxu0 %v218
    %v2003 = vpop.f32.mrf.mxu0
    %v2004 = vadd.f32 %v1991, %v2003
    %v2005 = vpop.f32.mrf.mxu0
    %2006 = vdwg.mxu0
    %v2007 = vxor.u32 %v1692, 2147483648
    %v2008 = vxor.u32 %v1744, 2147483648
    %v2009 = vxor.u32 %v1796, 2147483648
    %v2010 = vxor.u32 %v1848, 2147483648
    %v2011 = vxor.u32 %v1900, 2147483648
    %v2012 = vxor.u32 %v1952, 2147483648
    %v2013 = vxor.u32 %v2004, 2147483648
    %v2014 = vmul.f32 %v2007, 1.442695
    %v2015 = vpow.pop %v2014
    %v2016 = vmul.f32 %v2008, 1.442695
    %v2017 = vpow.pop %v2016
    %v2018 = vmul.f32 %v2009, 1.442695
    %v2019 = vpow.pop %v2018
    %v2020 = vmul.f32 %v2010, 1.442695
    %v2021 = vpow.pop %v2020
    %v2022 = vmul.f32 %v2011, 1.442695
    %v2023 = vpow.pop %v2022
    %v2024 = vmul.f32 %v2012, 1.442695
    %v2025 = vpow.pop %v2024
    %v2026 = vmul.f32 %v2013, 1.442695
    %v2027 = vpow.pop %v2026
    %v2028 = vadd.f32 %v2015, 1.0
    %v2029 = vadd.f32 %v2017, 1.0
    %v2030 = vadd.f32 %v2019, 1.0
    %v2031 = vadd.f32 %v2021, 1.0
    %v2032 = vadd.f32 %v2023, 1.0
    %v2033 = vadd.f32 %v2025, 1.0
    %v2034 = vadd.f32 %v2027, 1.0
    %v2035 = vrcp.pop %v2028
    %v2036 = vmul.f32 %v2028, %v2035
    %v2037 = vsub.f32 1.0, %v2036
    %v2038 = vmul.f32 %v2035, %v2037
    %v2039 = vadd.f32 %v2035, %v2038
    %vm2040 = vweird.f32 %v2028
    %vm2041 = vweird.f32 %v2035
    %vm2042 = vmor %vm2040, %vm2041
    %v2043 = vsel %vm2042, %v2035, %v2039
    %v2044 = vand.u32 2147483647, %v2028
    %vm2045 = vcmp.eq.f32.partialorder %v2044, 8.507059e+37
    %v2046 = vand.u32 %v2028, 2147483648
    %v2047 = vor.u32 1.1754944e-38, %v2046
    %v2048 = vsel %vm2045, %v2047, %v2043
    %v2049 = vmul.f32 1.0, %v2048
    %v2050 = vrcp.pop %v2029
    %v2051 = vmul.f32 %v2029, %v2050
    %v2052 = vsub.f32 1.0, %v2051
    %v2053 = vmul.f32 %v2050, %v2052
    %v2054 = vadd.f32 %v2050, %v2053
    %vm2055 = vweird.f32 %v2029
    %vm2056 = vweird.f32 %v2050
    %vm2057 = vmor %vm2055, %vm2056
    %v2058 = vsel %vm2057, %v2050, %v2054
    %v2059 = vand.u32 2147483647, %v2029
    %vm2060 = vcmp.eq.f32.partialorder %v2059, 8.507059e+37
    %v2061 = vand.u32 %v2029, 2147483648
    %v2062 = vor.u32 1.1754944e-38, %v2061
    %v2063 = vsel %vm2060, %v2062, %v2058
    %v2064 = vmul.f32 1.0, %v2063
    %v2065 = vrcp.pop %v2030
    %v2066 = vmul.f32 %v2030, %v2065
    %v2067 = vsub.f32 1.0, %v2066
    %v2068 = vmul.f32 %v2065, %v2067
    %v2069 = vadd.f32 %v2065, %v2068
    %vm2070 = vweird.f32 %v2030
    %vm2071 = vweird.f32 %v2065
    %vm2072 = vmor %vm2070, %vm2071
    %v2073 = vsel %vm2072, %v2065, %v2069
    %v2074 = vand.u32 2147483647, %v2030
    %vm2075 = vcmp.eq.f32.partialorder %v2074, 8.507059e+37
    %v2076 = vand.u32 %v2030, 2147483648
    %v2077 = vor.u32 1.1754944e-38, %v2076
    %v2078 = vsel %vm2075, %v2077, %v2073
    %v2079 = vmul.f32 1.0, %v2078
    %v2080 = vrcp.pop %v2031
    %v2081 = vmul.f32 %v2031, %v2080
    %v2082 = vsub.f32 1.0, %v2081
    %v2083 = vmul.f32 %v2080, %v2082
    %v2084 = vadd.f32 %v2080, %v2083
    %vm2085 = vweird.f32 %v2031
    %vm2086 = vweird.f32 %v2080
    %vm2087 = vmor %vm2085, %vm2086
    %v2088 = vsel %vm2087, %v2080, %v2084
    %v2089 = vand.u32 2147483647, %v2031
    %vm2090 = vcmp.eq.f32.partialorder %v2089, 8.507059e+37
    %v2091 = vand.u32 %v2031, 2147483648
    %v2092 = vor.u32 1.1754944e-38, %v2091
    %v2093 = vsel %vm2090, %v2092, %v2088
    %v2094 = vmul.f32 1.0, %v2093
    %v2095 = vrcp.pop %v2032
    %v2096 = vmul.f32 %v2032, %v2095
    %v2097 = vsub.f32 1.0, %v2096
    %v2098 = vmul.f32 %v2095, %v2097
    %v2099 = vadd.f32 %v2095, %v2098
    %vm2100 = vweird.f32 %v2032
    %vm2101 = vweird.f32 %v2095
    %vm2102 = vmor %vm2100, %vm2101
    %v2103 = vsel %vm2102, %v2095, %v2099
    %v2104 = vand.u32 2147483647, %v2032
    %vm2105 = vcmp.eq.f32.partialorder %v2104, 8.507059e+37
    %v2106 = vand.u32 %v2032, 2147483648
    %v2107 = vor.u32 1.1754944e-38, %v2106
    %v2108 = vsel %vm2105, %v2107, %v2103
    %v2109 = vmul.f32 1.0, %v2108
    %v2110 = vrcp.pop %v2033
    %v2111 = vmul.f32 %v2033, %v2110
    %v2112 = vsub.f32 1.0, %v2111
    %v2113 = vmul.f32 %v2110, %v2112
    %v2114 = vadd.f32 %v2110, %v2113
    %vm2115 = vweird.f32 %v2033
    %vm2116 = vweird.f32 %v2110
    %vm2117 = vmor %vm2115, %vm2116
    %v2118 = vsel %vm2117, %v2110, %v2114
    %v2119 = vand.u32 2147483647, %v2033
    %vm2120 = vcmp.eq.f32.partialorder %v2119, 8.507059e+37
    %v2121 = vand.u32 %v2033, 2147483648
    %v2122 = vor.u32 1.1754944e-38, %v2121
    %v2123 = vsel %vm2120, %v2122, %v2118
    %v2124 = vmul.f32 1.0, %v2123
    %v2125 = vrcp.pop %v2034
    %v2126 = vmul.f32 %v2034, %v2125
    %v2127 = vsub.f32 1.0, %v2126
    %v2128 = vmul.f32 %v2125, %v2127
    %v2129 = vadd.f32 %v2125, %v2128
    %vm2130 = vweird.f32 %v2034
    %vm2131 = vweird.f32 %v2125
    %vm2132 = vmor %vm2130, %vm2131
    %v2133 = vsel %vm2132, %v2125, %v2129
    %v2134 = vand.u32 2147483647, %v2034
    %vm2135 = vcmp.eq.f32.partialorder %v2134, 8.507059e+37
    %v2136 = vand.u32 %v2034, 2147483648
    %v2137 = vor.u32 1.1754944e-38, %v2136
    %v2138 = vsel %vm2135, %v2137, %v2133
    %v2139 = vmul.f32 1.0, %v2138
    %2140 = vst [vmem:[#allocation11] sm:$0xff] %v2049
    %2141 = vst [vmem:[#allocation11 + $0x8] sm:$0xff] %v2064
    %2142 = vst [vmem:[#allocation11 + $0x10] sm:$0xff] %v2079
    %2143 = vst [vmem:[#allocation11 + $0x18] sm:$0xff] %v2094
    %2144 = vst [vmem:[#allocation11 + $0x20] sm:$0xff] %v2109
    %2145 = vst [vmem:[#allocation11 + $0x28] sm:$0xff] %v2124
    %2146 = vst [vmem:[#allocation11 + $0x30] sm:$0xff] %v2139
    // Predicated region
    $region42: #{tpu_custom_call.1} parent=1 // pred_check
      _
    $region43: #{tpu_custom_call.1} parent=1 // pred_check_branch
      %2148 = sbr.rel (0) target = $region45
    $region44: #{tpu_custom_call.1} parent=1 // pred_region
      %2150 = vsyncadd [#allocation4], 0
      %s2152 = sshll.u32 [#allocation11], 4
      %s2153 = int_to_ptr.vmem [resolvable:$true] %s2152
      %s2154 = sshll.u32 %s5, 4
      %s2155 = int_to_ptr.hbm [resolvable:$true] %s2154
      %2157 = dma.vmem_to_hbm [thread:$0]  %s2153, 896, %s2155, [#allocation4]
    $region45: #{tpu_custom_call.1} parent=1 // pred_fallthru
      _
    // Predicated region
    $region46: #{tpu_custom_call.1} parent=1 // pred_check
      _
    $region47: #{tpu_custom_call.1} parent=1 // pred_check_branch
      %2159 = sbr.rel (0) target = $region49
    $region48: #{tpu_custom_call.1} parent=1 // pred_region
      %2161 = dma.done [#allocation4], 896
    $region49: #{tpu_custom_call.1} parent=1 // pred_fallthru
      _
    %2162 = vsyncpa [#allocation3], 1
    %2163 = vsyncpa [#allocation6], 1
    %2164 = vsyncpa [#allocation9], 1
    %2165 = vsyncpa [#allocation4], 1

</llo_original>
